<compile_context>
chip_gen: v5e
topology: v5e:2x2
jax: 0.10.0
libtpu: 0.0.40
codegen_flags: <defaults>
</compile_context>

<pallas_src>
import functools

import jax
import jax.numpy as jnp
from jax import lax
from jax.experimental import pallas as pl
from jax.experimental.pallas import tpu as pltpu


def _basic_block_kernel(w_ref, shift_ref, mask_ref, xp_ref, out_ref,
                        *, H, W, Cin, Cout, neg_slope):
    """One batch element per grid step.

    w_ref    : (Cout, 9*Cin)        conv weights with BN scale folded in;
                                    column index = (kh*3 + kw)*Cin + ci
    shift_ref: (Cout, 1)            folded shift = beta + (conv_bias - mean)*scale
    mask_ref : (2, H*W)             row 0: 1.0 where column w-1 is in-image
                                    row 1: 1.0 where column w+1 is in-image
    xp_ref   : (1, Cin, H*W+2W+2)   flat input with W+1 zeros at each end
                                    (row halo for the top/bottom conv taps)
    out_ref  : (1, Cout, H*W)
    """
    HW = H * W
    xp = xp_ref[0]                         # (Cin, HW + 2W + 2)
    left_ok = mask_ref[0:1, :]             # (1, HW)
    right_ok = mask_ref[1:2, :]            # (1, HW)

    acc = jnp.zeros((Cout, HW), dtype=jnp.float32)
    residual = None
    t = 0
    for dh in (-1, 0, 1):
        for dw in (-1, 0, 1):
            # flat index of tap (dh, dw) for output position q is
            # q + dh*W + dw + (W+1)  ->  static lane-shifted slice of xp.
            off = (dh + 1) * W + (dw + 1)
            xs = xp[:, off:off + HW]       # (Cin, HW)
            if dh == 0 and dw == 0:
                residual = xs              # identity path == interior of xp
            if dw == -1:
                xs = xs * left_ok          # zero-pad left column
            elif dw == 1:
                xs = xs * right_ok         # zero-pad right column
            # VPU rank-1 MACs: acc[co, q] += w[co, tap, ci] * xs[ci, q]
            for ci in range(Cin):
                idx = t * Cin + ci
                w_col = w_ref[:, idx:idx + 1]          # (Cout, 1)
                acc = acc + w_col * xs[ci:ci + 1, :]   # -> (Cout, HW)
            t += 1

    y = acc + shift_ref[...]                           # folded BatchNorm shift
    y = jnp.where(y > 0, y, neg_slope * y)             # LeakyReLU(0.2)
    out_ref[0, :, :] = (residual + y).astype(out_ref.dtype)


def basic_block_forward(x_nchw, w_oihw, conv_bias, gamma, beta, run_mean, run_var,
                        eps=1e-5, neg_slope=0.2):
    """x_nchw: (N, Cin, H, W) float32, returns (N, Cout, H, W) float32."""
    N, Cin, H, W = x_nchw.shape
    Cout = w_oihw.shape[0]
    assert Cin == Cout, "downsample=None requires in_channels == out_channels"
    HW = H * W
    HWp = HW + 2 * (W + 1)

    # NCHW -> flat spatial (free reshape, no transpose) + row-halo zero pad.
    # (For production sizes this halo fill could move into the kernel via a
    #  VMEM scratch to avoid the extra HBM pass.)
    x_flat = x_nchw.astype(jnp.float32).reshape(N, Cin, HW)
    x_pad = jnp.pad(x_flat, ((0, 0), (0, 0), (W + 1, W + 1)))

    # Fold conv bias + BatchNorm into the weights / a single shift.
    scale = (gamma / jnp.sqrt(run_var + eps)).astype(jnp.float32)
    w_f = jnp.transpose(w_oihw.astype(jnp.float32), (0, 2, 3, 1))   # (Cout,3,3,Cin)
    w_f = w_f * scale[:, None, None, None]
    w2 = w_f.reshape(Cout, 9 * Cin)                                  # one dense tile
    shift2 = (beta + (conv_bias - run_mean) * scale).astype(jnp.float32)
    shift2 = shift2.reshape(Cout, 1)

    # Column-boundary masks (left / right zero padding), precomputed once.
    col = jnp.arange(HW, dtype=jnp.int32) % W
    masks = jnp.stack([(col >= 1).astype(jnp.float32),
                       (col <= W - 2).astype(jnp.float32)])          # (2, HW)

    kernel = functools.partial(_basic_block_kernel, H=H, W=W, Cin=Cin, Cout=Cout,
                               neg_slope=neg_slope)

    out_flat = pl.pallas_call(
        kernel,
        out_shape=jax.ShapeDtypeStruct((N, Cout, HW), jnp.float32),
        grid_spec=pltpu.PrefetchScalarGridSpec(
            num_scalar_prefetch=0,
            grid=(N,),
            in_specs=[
                pl.BlockSpec((Cout, 9 * Cin), lambda n: (0, 0)),
                pl.BlockSpec((Cout, 1), lambda n: (0, 0)),
                pl.BlockSpec((2, HW), lambda n: (0, 0)),
                pl.BlockSpec((1, Cin, HWp), lambda n: (n, 0, 0)),
            ],
            out_specs=pl.BlockSpec((1, Cout, HW), lambda n: (n, 0, 0)),
        ),
        compiler_params=pltpu.CompilerParams(
            dimension_semantics=("parallel",)),
    )(w2, shift2, masks, x_pad)

    # Flat spatial -> NCHW (free reshape).
    return out_flat.reshape(N, Cout, H, W)


def _reference(x_nchw, w_oihw, conv_bias, gamma, beta, run_mean, run_var,
               eps=1e-5, neg_slope=0.2):
    """Pure-JAX NCHW reference mirroring the PyTorch forward."""
    y = lax.conv_general_dilated(
        x_nchw, w_oihw, window_strides=(1, 1), padding=((1, 1), (1, 1)),
        dimension_numbers=("NCHW", "OIHW", "NCHW"))
    y = y + conv_bias[None, :, None, None]
    y = (y - run_mean[None, :, None, None]) / jnp.sqrt(run_var[None, :, None, None] + eps)
    y = y * gamma[None, :, None, None] + beta[None, :, None, None]
    y = jnp.where(y > 0, y, neg_slope * y)
    return x_nchw + y


if __name__ == "__main__":
    # Shapes consistent with BasicBlock(in=4, out=4, stride=1, downsample=None, pad=1, dilation=1)
    N, C, H, W = 2, 4, 16, 16

    key = jax.random.PRNGKey(0)
    k_x, k_w, k_b, k_g, k_be, k_m, k_v = jax.random.split(key, 7)

    x = jax.random.normal(k_x, (N, C, H, W), dtype=jnp.float32)
    w = jax.random.normal(k_w, (C, C, 3, 3), dtype=jnp.float32) * 0.1   # OIHW
    conv_bias = jax.random.normal(k_b, (C,), dtype=jnp.float32) * 0.1
    gamma = 1.0 + 0.1 * jax.random.normal(k_g, (C,), dtype=jnp.float32)
    beta = 0.1 * jax.random.normal(k_be, (C,), dtype=jnp.float32)
    run_mean = 0.1 * jax.random.normal(k_m, (C,), dtype=jnp.float32)
    run_var = jnp.abs(jax.random.normal(k_v, (C,), dtype=jnp.float32)) + 0.5

    out = basic_block_forward(x, w, conv_bias, gamma, beta, run_mean, run_var)
    out = jax.block_until_ready(out)

    ref = jax.block_until_ready(
        _reference(x, w, conv_bias, gamma, beta, run_mean, run_var))
    assert out.shape == (N, C, H, W)
    assert jnp.allclose(out, ref, atol=1e-4, rtol=1e-4), "mismatch vs reference"

    print("KERNEL_OK")
</pallas_src>

<mosaic_0001>
module attributes {stable_mosaic.version = 11 : i64} {
  func.func @_basic_block_kernel(%arg0: i32, %arg1: memref<4x36xf32, #tpu.memory_space<vmem>>, %arg2: memref<4x1xf32, #tpu.memory_space<vmem>>, %arg3: memref<2x256xf32, #tpu.memory_space<vmem>>, %arg4: memref<1x4x290xf32, #tpu.memory_space<vmem>>, %arg5: memref<1x4x256xf32, #tpu.memory_space<vmem>>) attributes {dimension_semantics = [#tpu.dimension_semantics<parallel>], iteration_bounds = array<i64: 2>, scalar_prefetch = 0 : i64, scratch_operands = 0 : i64, tpu.core_type = #tpu.core_type<tc>, window_params = [{pipeline_mode = #tpu.pipeline_mode<synchronous>, transform_indices = @transform_0, window_bounds = array<i64: 4, 36>}, {pipeline_mode = #tpu.pipeline_mode<synchronous>, transform_indices = @transform_1, window_bounds = array<i64: 4, 1>}, {pipeline_mode = #tpu.pipeline_mode<synchronous>, transform_indices = @transform_2, window_bounds = array<i64: 2, 256>}, {transform_indices = @transform_3, window_bounds = array<i64: 1, 4, 290>}, {transform_indices = @transform_4, window_bounds = array<i64: 1, 4, 256>}]} {
    %c0 = arith.constant 0 : index
    %c0_0 = arith.constant 0 : index
    %c0_1 = arith.constant 0 : index
    %0 = vector.load %arg4[%c0, %c0_0, %c0_1] : memref<1x4x290xf32, #tpu.memory_space<vmem>>, vector<1x4x290xf32>
    %1 = vector.shape_cast %0 : vector<1x4x290xf32> to vector<4x290xf32>
    %c0_2 = arith.constant 0 : index
    %c0_3 = arith.constant 0 : index
    %2 = vector.load %arg3[%c0_2, %c0_3] : memref<2x256xf32, #tpu.memory_space<vmem>>, vector<1x256xf32>
    %c1 = arith.constant 1 : index
    %c0_4 = arith.constant 0 : index
    %3 = vector.load %arg3[%c1, %c0_4] : memref<2x256xf32, #tpu.memory_space<vmem>>, vector<1x256xf32>
    %cst = arith.constant 0.000000e+00 : f32
    %4 = vector.broadcast %cst : f32 to vector<4x256xf32>
    %5 = vector.extract_strided_slice %1 {offsets = [0, 0], sizes = [4, 256], strides = [1, 1]} : vector<4x290xf32> to vector<4x256xf32>
    %6 = vector.broadcast %2 : vector<1x256xf32> to vector<4x256xf32>
    %7 = arith.mulf %5, %6 : vector<4x256xf32>
    %c0_5 = arith.constant 0 : index
    %c0_6 = arith.constant 0 : index
    %8 = vector.load %arg1[%c0_5, %c0_6] : memref<4x36xf32, #tpu.memory_space<vmem>>, vector<4x1xf32>
    %9 = vector.extract_strided_slice %7 {offsets = [0, 0], sizes = [1, 256], strides = [1, 1]} : vector<4x256xf32> to vector<1x256xf32>
    %10 = vector.broadcast %8 : vector<4x1xf32> to vector<4x256xf32>
    %11 = vector.broadcast %9 : vector<1x256xf32> to vector<4x256xf32>
    %12 = arith.mulf %10, %11 : vector<4x256xf32>
    %13 = arith.addf %4, %12 : vector<4x256xf32>
    %c0_7 = arith.constant 0 : index
    %c1_8 = arith.constant 1 : index
    %14 = vector.load %arg1[%c0_7, %c1_8] : memref<4x36xf32, #tpu.memory_space<vmem>>, vector<4x1xf32>
    %15 = vector.extract_strided_slice %7 {offsets = [1, 0], sizes = [1, 256], strides = [1, 1]} : vector<4x256xf32> to vector<1x256xf32>
    %16 = vector.broadcast %14 : vector<4x1xf32> to vector<4x256xf32>
    %17 = vector.broadcast %15 : vector<1x256xf32> to vector<4x256xf32>
    %18 = arith.mulf %16, %17 : vector<4x256xf32>
    %19 = arith.addf %13, %18 : vector<4x256xf32>
    %c0_9 = arith.constant 0 : index
    %c2 = arith.constant 2 : index
    %20 = vector.load %arg1[%c0_9, %c2] : memref<4x36xf32, #tpu.memory_space<vmem>>, vector<4x1xf32>
    %21 = vector.extract_strided_slice %7 {offsets = [2, 0], sizes = [1, 256], strides = [1, 1]} : vector<4x256xf32> to vector<1x256xf32>
    %22 = vector.broadcast %20 : vector<4x1xf32> to vector<4x256xf32>
    %23 = vector.broadcast %21 : vector<1x256xf32> to vector<4x256xf32>
    %24 = arith.mulf %22, %23 : vector<4x256xf32>
    %25 = arith.addf %19, %24 : vector<4x256xf32>
    %c0_10 = arith.constant 0 : index
    %c3 = arith.constant 3 : index
    %26 = vector.load %arg1[%c0_10, %c3] : memref<4x36xf32, #tpu.memory_space<vmem>>, vector<4x1xf32>
    %27 = vector.extract_strided_slice %7 {offsets = [3, 0], sizes = [1, 256], strides = [1, 1]} : vector<4x256xf32> to vector<1x256xf32>
    %28 = vector.broadcast %26 : vector<4x1xf32> to vector<4x256xf32>
    %29 = vector.broadcast %27 : vector<1x256xf32> to vector<4x256xf32>
    %30 = arith.mulf %28, %29 : vector<4x256xf32>
    %31 = arith.addf %25, %30 : vector<4x256xf32>
    %32 = vector.extract_strided_slice %1 {offsets = [0, 1], sizes = [4, 256], strides = [1, 1]} : vector<4x290xf32> to vector<4x256xf32>
    %c0_11 = arith.constant 0 : index
    %c4 = arith.constant 4 : index
    %33 = vector.load %arg1[%c0_11, %c4] : memref<4x36xf32, #tpu.memory_space<vmem>>, vector<4x1xf32>
    %34 = vector.extract_strided_slice %32 {offsets = [0, 0], sizes = [1, 256], strides = [1, 1]} : vector<4x256xf32> to vector<1x256xf32>
    %35 = vector.broadcast %33 : vector<4x1xf32> to vector<4x256xf32>
    %36 = vector.broadcast %34 : vector<1x256xf32> to vector<4x256xf32>
    %37 = arith.mulf %35, %36 : vector<4x256xf32>
    %38 = arith.addf %31, %37 : vector<4x256xf32>
    %c0_12 = arith.constant 0 : index
    %c5 = arith.constant 5 : index
    %39 = vector.load %arg1[%c0_12, %c5] : memref<4x36xf32, #tpu.memory_space<vmem>>, vector<4x1xf32>
    %40 = vector.extract_strided_slice %32 {offsets = [1, 0], sizes = [1, 256], strides = [1, 1]} : vector<4x256xf32> to vector<1x256xf32>
    %41 = vector.broadcast %39 : vector<4x1xf32> to vector<4x256xf32>
    %42 = vector.broadcast %40 : vector<1x256xf32> to vector<4x256xf32>
    %43 = arith.mulf %41, %42 : vector<4x256xf32>
    %44 = arith.addf %38, %43 : vector<4x256xf32>
    %c0_13 = arith.constant 0 : index
    %c6 = arith.constant 6 : index
    %45 = vector.load %arg1[%c0_13, %c6] : memref<4x36xf32, #tpu.memory_space<vmem>>, vector<4x1xf32>
    %46 = vector.extract_strided_slice %32 {offsets = [2, 0], sizes = [1, 256], strides = [1, 1]} : vector<4x256xf32> to vector<1x256xf32>
    %47 = vector.broadcast %45 : vector<4x1xf32> to vector<4x256xf32>
    %48 = vector.broadcast %46 : vector<1x256xf32> to vector<4x256xf32>
    %49 = arith.mulf %47, %48 : vector<4x256xf32>
    %50 = arith.addf %44, %49 : vector<4x256xf32>
    %c0_14 = arith.constant 0 : index
    %c7 = arith.constant 7 : index
    %51 = vector.load %arg1[%c0_14, %c7] : memref<4x36xf32, #tpu.memory_space<vmem>>, vector<4x1xf32>
    %52 = vector.extract_strided_slice %32 {offsets = [3, 0], sizes = [1, 256], strides = [1, 1]} : vector<4x256xf32> to vector<1x256xf32>
    %53 = vector.broadcast %51 : vector<4x1xf32> to vector<4x256xf32>
    %54 = vector.broadcast %52 : vector<1x256xf32> to vector<4x256xf32>
    %55 = arith.mulf %53, %54 : vector<4x256xf32>
    %56 = arith.addf %50, %55 : vector<4x256xf32>
    %57 = vector.extract_strided_slice %1 {offsets = [0, 2], sizes = [4, 256], strides = [1, 1]} : vector<4x290xf32> to vector<4x256xf32>
    %58 = vector.broadcast %3 : vector<1x256xf32> to vector<4x256xf32>
    %59 = arith.mulf %57, %58 : vector<4x256xf32>
    %c0_15 = arith.constant 0 : index
    %c8 = arith.constant 8 : index
    %60 = vector.load %arg1[%c0_15, %c8] : memref<4x36xf32, #tpu.memory_space<vmem>>, vector<4x1xf32>
    %61 = vector.extract_strided_slice %59 {offsets = [0, 0], sizes = [1, 256], strides = [1, 1]} : vector<4x256xf32> to vector<1x256xf32>
    %62 = vector.broadcast %60 : vector<4x1xf32> to vector<4x256xf32>
    %63 = vector.broadcast %61 : vector<1x256xf32> to vector<4x256xf32>
    %64 = arith.mulf %62, %63 : vector<4x256xf32>
    %65 = arith.addf %56, %64 : vector<4x256xf32>
    %c0_16 = arith.constant 0 : index
    %c9 = arith.constant 9 : index
    %66 = vector.load %arg1[%c0_16, %c9] : memref<4x36xf32, #tpu.memory_space<vmem>>, vector<4x1xf32>
    %67 = vector.extract_strided_slice %59 {offsets = [1, 0], sizes = [1, 256], strides = [1, 1]} : vector<4x256xf32> to vector<1x256xf32>
    %68 = vector.broadcast %66 : vector<4x1xf32> to vector<4x256xf32>
    %69 = vector.broadcast %67 : vector<1x256xf32> to vector<4x256xf32>
    %70 = arith.mulf %68, %69 : vector<4x256xf32>
    %71 = arith.addf %65, %70 : vector<4x256xf32>
    %c0_17 = arith.constant 0 : index
    %c10 = arith.constant 10 : index
    %72 = vector.load %arg1[%c0_17, %c10] : memref<4x36xf32, #tpu.memory_space<vmem>>, vector<4x1xf32>
    %73 = vector.extract_strided_slice %59 {offsets = [2, 0], sizes = [1, 256], strides = [1, 1]} : vector<4x256xf32> to vector<1x256xf32>
    %74 = vector.broadcast %72 : vector<4x1xf32> to vector<4x256xf32>
    %75 = vector.broadcast %73 : vector<1x256xf32> to vector<4x256xf32>
    %76 = arith.mulf %74, %75 : vector<4x256xf32>
    %77 = arith.addf %71, %76 : vector<4x256xf32>
    %c0_18 = arith.constant 0 : index
    %c11 = arith.constant 11 : index
    %78 = vector.load %arg1[%c0_18, %c11] : memref<4x36xf32, #tpu.memory_space<vmem>>, vector<4x1xf32>
    %79 = vector.extract_strided_slice %59 {offsets = [3, 0], sizes = [1, 256], strides = [1, 1]} : vector<4x256xf32> to vector<1x256xf32>
    %80 = vector.broadcast %78 : vector<4x1xf32> to vector<4x256xf32>
    %81 = vector.broadcast %79 : vector<1x256xf32> to vector<4x256xf32>
    %82 = arith.mulf %80, %81 : vector<4x256xf32>
    %83 = arith.addf %77, %82 : vector<4x256xf32>
    %84 = vector.extract_strided_slice %1 {offsets = [0, 16], sizes = [4, 256], strides = [1, 1]} : vector<4x290xf32> to vector<4x256xf32>
    %85 = vector.broadcast %2 : vector<1x256xf32> to vector<4x256xf32>
    %86 = arith.mulf %84, %85 : vector<4x256xf32>
    %c0_19 = arith.constant 0 : index
    %c12 = arith.constant 12 : index
    %87 = vector.load %arg1[%c0_19, %c12] : memref<4x36xf32, #tpu.memory_space<vmem>>, vector<4x1xf32>
    %88 = vector.extract_strided_slice %86 {offsets = [0, 0], sizes = [1, 256], strides = [1, 1]} : vector<4x256xf32> to vector<1x256xf32>
    %89 = vector.broadcast %87 : vector<4x1xf32> to vector<4x256xf32>
    %90 = vector.broadcast %88 : vector<1x256xf32> to vector<4x256xf32>
    %91 = arith.mulf %89, %90 : vector<4x256xf32>
    %92 = arith.addf %83, %91 : vector<4x256xf32>
    %c0_20 = arith.constant 0 : index
    %c13 = arith.constant 13 : index
    %93 = vector.load %arg1[%c0_20, %c13] : memref<4x36xf32, #tpu.memory_space<vmem>>, vector<4x1xf32>
    %94 = vector.extract_strided_slice %86 {offsets = [1, 0], sizes = [1, 256], strides = [1, 1]} : vector<4x256xf32> to vector<1x256xf32>
    %95 = vector.broadcast %93 : vector<4x1xf32> to vector<4x256xf32>
    %96 = vector.broadcast %94 : vector<1x256xf32> to vector<4x256xf32>
    %97 = arith.mulf %95, %96 : vector<4x256xf32>
    %98 = arith.addf %92, %97 : vector<4x256xf32>
    %c0_21 = arith.constant 0 : index
    %c14 = arith.constant 14 : index
    %99 = vector.load %arg1[%c0_21, %c14] : memref<4x36xf32, #tpu.memory_space<vmem>>, vector<4x1xf32>
    %100 = vector.extract_strided_slice %86 {offsets = [2, 0], sizes = [1, 256], strides = [1, 1]} : vector<4x256xf32> to vector<1x256xf32>
    %101 = vector.broadcast %99 : vector<4x1xf32> to vector<4x256xf32>
    %102 = vector.broadcast %100 : vector<1x256xf32> to vector<4x256xf32>
    %103 = arith.mulf %101, %102 : vector<4x256xf32>
    %104 = arith.addf %98, %103 : vector<4x256xf32>
    %c0_22 = arith.constant 0 : index
    %c15 = arith.constant 15 : index
    %105 = vector.load %arg1[%c0_22, %c15] : memref<4x36xf32, #tpu.memory_space<vmem>>, vector<4x1xf32>
    %106 = vector.extract_strided_slice %86 {offsets = [3, 0], sizes = [1, 256], strides = [1, 1]} : vector<4x256xf32> to vector<1x256xf32>
    %107 = vector.broadcast %105 : vector<4x1xf32> to vector<4x256xf32>
    %108 = vector.broadcast %106 : vector<1x256xf32> to vector<4x256xf32>
    %109 = arith.mulf %107, %108 : vector<4x256xf32>
    %110 = arith.addf %104, %109 : vector<4x256xf32>
    %111 = vector.extract_strided_slice %1 {offsets = [0, 17], sizes = [4, 256], strides = [1, 1]} : vector<4x290xf32> to vector<4x256xf32>
    %c0_23 = arith.constant 0 : index
    %c16 = arith.constant 16 : index
    %112 = vector.load %arg1[%c0_23, %c16] : memref<4x36xf32, #tpu.memory_space<vmem>>, vector<4x1xf32>
    %113 = vector.extract_strided_slice %111 {offsets = [0, 0], sizes = [1, 256], strides = [1, 1]} : vector<4x256xf32> to vector<1x256xf32>
    %114 = vector.broadcast %112 : vector<4x1xf32> to vector<4x256xf32>
    %115 = vector.broadcast %113 : vector<1x256xf32> to vector<4x256xf32>
    %116 = arith.mulf %114, %115 : vector<4x256xf32>
    %117 = arith.addf %110, %116 : vector<4x256xf32>
    %c0_24 = arith.constant 0 : index
    %c17 = arith.constant 17 : index
    %118 = vector.load %arg1[%c0_24, %c17] : memref<4x36xf32, #tpu.memory_space<vmem>>, vector<4x1xf32>
    %119 = vector.extract_strided_slice %111 {offsets = [1, 0], sizes = [1, 256], strides = [1, 1]} : vector<4x256xf32> to vector<1x256xf32>
    %120 = vector.broadcast %118 : vector<4x1xf32> to vector<4x256xf32>
    %121 = vector.broadcast %119 : vector<1x256xf32> to vector<4x256xf32>
    %122 = arith.mulf %120, %121 : vector<4x256xf32>
    %123 = arith.addf %117, %122 : vector<4x256xf32>
    %c0_25 = arith.constant 0 : index
    %c18 = arith.constant 18 : index
    %124 = vector.load %arg1[%c0_25, %c18] : memref<4x36xf32, #tpu.memory_space<vmem>>, vector<4x1xf32>
    %125 = vector.extract_strided_slice %111 {offsets = [2, 0], sizes = [1, 256], strides = [1, 1]} : vector<4x256xf32> to vector<1x256xf32>
    %126 = vector.broadcast %124 : vector<4x1xf32> to vector<4x256xf32>
    %127 = vector.broadcast %125 : vector<1x256xf32> to vector<4x256xf32>
    %128 = arith.mulf %126, %127 : vector<4x256xf32>
    %129 = arith.addf %123, %128 : vector<4x256xf32>
    %c0_26 = arith.constant 0 : index
    %c19 = arith.constant 19 : index
    %130 = vector.load %arg1[%c0_26, %c19] : memref<4x36xf32, #tpu.memory_space<vmem>>, vector<4x1xf32>
    %131 = vector.extract_strided_slice %111 {offsets = [3, 0], sizes = [1, 256], strides = [1, 1]} : vector<4x256xf32> to vector<1x256xf32>
    %132 = vector.broadcast %130 : vector<4x1xf32> to vector<4x256xf32>
    %133 = vector.broadcast %131 : vector<1x256xf32> to vector<4x256xf32>
    %134 = arith.mulf %132, %133 : vector<4x256xf32>
    %135 = arith.addf %129, %134 : vector<4x256xf32>
    %136 = vector.extract_strided_slice %1 {offsets = [0, 18], sizes = [4, 256], strides = [1, 1]} : vector<4x290xf32> to vector<4x256xf32>
    %137 = vector.broadcast %3 : vector<1x256xf32> to vector<4x256xf32>
    %138 = arith.mulf %136, %137 : vector<4x256xf32>
    %c0_27 = arith.constant 0 : index
    %c20 = arith.constant 20 : index
    %139 = vector.load %arg1[%c0_27, %c20] : memref<4x36xf32, #tpu.memory_space<vmem>>, vector<4x1xf32>
    %140 = vector.extract_strided_slice %138 {offsets = [0, 0], sizes = [1, 256], strides = [1, 1]} : vector<4x256xf32> to vector<1x256xf32>
    %141 = vector.broadcast %139 : vector<4x1xf32> to vector<4x256xf32>
    %142 = vector.broadcast %140 : vector<1x256xf32> to vector<4x256xf32>
    %143 = arith.mulf %141, %142 : vector<4x256xf32>
    %144 = arith.addf %135, %143 : vector<4x256xf32>
    %c0_28 = arith.constant 0 : index
    %c21 = arith.constant 21 : index
    %145 = vector.load %arg1[%c0_28, %c21] : memref<4x36xf32, #tpu.memory_space<vmem>>, vector<4x1xf32>
    %146 = vector.extract_strided_slice %138 {offsets = [1, 0], sizes = [1, 256], strides = [1, 1]} : vector<4x256xf32> to vector<1x256xf32>
    %147 = vector.broadcast %145 : vector<4x1xf32> to vector<4x256xf32>
    %148 = vector.broadcast %146 : vector<1x256xf32> to vector<4x256xf32>
    %149 = arith.mulf %147, %148 : vector<4x256xf32>
    %150 = arith.addf %144, %149 : vector<4x256xf32>
    %c0_29 = arith.constant 0 : index
    %c22 = arith.constant 22 : index
    %151 = vector.load %arg1[%c0_29, %c22] : memref<4x36xf32, #tpu.memory_space<vmem>>, vector<4x1xf32>
    %152 = vector.extract_strided_slice %138 {offsets = [2, 0], sizes = [1, 256], strides = [1, 1]} : vector<4x256xf32> to vector<1x256xf32>
    %153 = vector.broadcast %151 : vector<4x1xf32> to vector<4x256xf32>
    %154 = vector.broadcast %152 : vector<1x256xf32> to vector<4x256xf32>
    %155 = arith.mulf %153, %154 : vector<4x256xf32>
    %156 = arith.addf %150, %155 : vector<4x256xf32>
    %c0_30 = arith.constant 0 : index
    %c23 = arith.constant 23 : index
    %157 = vector.load %arg1[%c0_30, %c23] : memref<4x36xf32, #tpu.memory_space<vmem>>, vector<4x1xf32>
    %158 = vector.extract_strided_slice %138 {offsets = [3, 0], sizes = [1, 256], strides = [1, 1]} : vector<4x256xf32> to vector<1x256xf32>
    %159 = vector.broadcast %157 : vector<4x1xf32> to vector<4x256xf32>
    %160 = vector.broadcast %158 : vector<1x256xf32> to vector<4x256xf32>
    %161 = arith.mulf %159, %160 : vector<4x256xf32>
    %162 = arith.addf %156, %161 : vector<4x256xf32>
    %163 = vector.extract_strided_slice %1 {offsets = [0, 32], sizes = [4, 256], strides = [1, 1]} : vector<4x290xf32> to vector<4x256xf32>
    %164 = vector.broadcast %2 : vector<1x256xf32> to vector<4x256xf32>
    %165 = arith.mulf %163, %164 : vector<4x256xf32>
    %c0_31 = arith.constant 0 : index
    %c24 = arith.constant 24 : index
    %166 = vector.load %arg1[%c0_31, %c24] : memref<4x36xf32, #tpu.memory_space<vmem>>, vector<4x1xf32>
    %167 = vector.extract_strided_slice %165 {offsets = [0, 0], sizes = [1, 256], strides = [1, 1]} : vector<4x256xf32> to vector<1x256xf32>
    %168 = vector.broadcast %166 : vector<4x1xf32> to vector<4x256xf32>
    %169 = vector.broadcast %167 : vector<1x256xf32> to vector<4x256xf32>
    %170 = arith.mulf %168, %169 : vector<4x256xf32>
    %171 = arith.addf %162, %170 : vector<4x256xf32>
    %c0_32 = arith.constant 0 : index
    %c25 = arith.constant 25 : index
    %172 = vector.load %arg1[%c0_32, %c25] : memref<4x36xf32, #tpu.memory_space<vmem>>, vector<4x1xf32>
    %173 = vector.extract_strided_slice %165 {offsets = [1, 0], sizes = [1, 256], strides = [1, 1]} : vector<4x256xf32> to vector<1x256xf32>
    %174 = vector.broadcast %172 : vector<4x1xf32> to vector<4x256xf32>
    %175 = vector.broadcast %173 : vector<1x256xf32> to vector<4x256xf32>
    %176 = arith.mulf %174, %175 : vector<4x256xf32>
    %177 = arith.addf %171, %176 : vector<4x256xf32>
    %c0_33 = arith.constant 0 : index
    %c26 = arith.constant 26 : index
    %178 = vector.load %arg1[%c0_33, %c26] : memref<4x36xf32, #tpu.memory_space<vmem>>, vector<4x1xf32>
    %179 = vector.extract_strided_slice %165 {offsets = [2, 0], sizes = [1, 256], strides = [1, 1]} : vector<4x256xf32> to vector<1x256xf32>
    %180 = vector.broadcast %178 : vector<4x1xf32> to vector<4x256xf32>
    %181 = vector.broadcast %179 : vector<1x256xf32> to vector<4x256xf32>
    %182 = arith.mulf %180, %181 : vector<4x256xf32>
    %183 = arith.addf %177, %182 : vector<4x256xf32>
    %c0_34 = arith.constant 0 : index
    %c27 = arith.constant 27 : index
    %184 = vector.load %arg1[%c0_34, %c27] : memref<4x36xf32, #tpu.memory_space<vmem>>, vector<4x1xf32>
    %185 = vector.extract_strided_slice %165 {offsets = [3, 0], sizes = [1, 256], strides = [1, 1]} : vector<4x256xf32> to vector<1x256xf32>
    %186 = vector.broadcast %184 : vector<4x1xf32> to vector<4x256xf32>
    %187 = vector.broadcast %185 : vector<1x256xf32> to vector<4x256xf32>
    %188 = arith.mulf %186, %187 : vector<4x256xf32>
    %189 = arith.addf %183, %188 : vector<4x256xf32>
    %190 = vector.extract_strided_slice %1 {offsets = [0, 33], sizes = [4, 256], strides = [1, 1]} : vector<4x290xf32> to vector<4x256xf32>
    %c0_35 = arith.constant 0 : index
    %c28 = arith.constant 28 : index
    %191 = vector.load %arg1[%c0_35, %c28] : memref<4x36xf32, #tpu.memory_space<vmem>>, vector<4x1xf32>
    %192 = vector.extract_strided_slice %190 {offsets = [0, 0], sizes = [1, 256], strides = [1, 1]} : vector<4x256xf32> to vector<1x256xf32>
    %193 = vector.broadcast %191 : vector<4x1xf32> to vector<4x256xf32>
    %194 = vector.broadcast %192 : vector<1x256xf32> to vector<4x256xf32>
    %195 = arith.mulf %193, %194 : vector<4x256xf32>
    %196 = arith.addf %189, %195 : vector<4x256xf32>
    %c0_36 = arith.constant 0 : index
    %c29 = arith.constant 29 : index
    %197 = vector.load %arg1[%c0_36, %c29] : memref<4x36xf32, #tpu.memory_space<vmem>>, vector<4x1xf32>
    %198 = vector.extract_strided_slice %190 {offsets = [1, 0], sizes = [1, 256], strides = [1, 1]} : vector<4x256xf32> to vector<1x256xf32>
    %199 = vector.broadcast %197 : vector<4x1xf32> to vector<4x256xf32>
    %200 = vector.broadcast %198 : vector<1x256xf32> to vector<4x256xf32>
    %201 = arith.mulf %199, %200 : vector<4x256xf32>
    %202 = arith.addf %196, %201 : vector<4x256xf32>
    %c0_37 = arith.constant 0 : index
    %c30 = arith.constant 30 : index
    %203 = vector.load %arg1[%c0_37, %c30] : memref<4x36xf32, #tpu.memory_space<vmem>>, vector<4x1xf32>
    %204 = vector.extract_strided_slice %190 {offsets = [2, 0], sizes = [1, 256], strides = [1, 1]} : vector<4x256xf32> to vector<1x256xf32>
    %205 = vector.broadcast %203 : vector<4x1xf32> to vector<4x256xf32>
    %206 = vector.broadcast %204 : vector<1x256xf32> to vector<4x256xf32>
    %207 = arith.mulf %205, %206 : vector<4x256xf32>
    %208 = arith.addf %202, %207 : vector<4x256xf32>
    %c0_38 = arith.constant 0 : index
    %c31 = arith.constant 31 : index
    %209 = vector.load %arg1[%c0_38, %c31] : memref<4x36xf32, #tpu.memory_space<vmem>>, vector<4x1xf32>
    %210 = vector.extract_strided_slice %190 {offsets = [3, 0], sizes = [1, 256], strides = [1, 1]} : vector<4x256xf32> to vector<1x256xf32>
    %211 = vector.broadcast %209 : vector<4x1xf32> to vector<4x256xf32>
    %212 = vector.broadcast %210 : vector<1x256xf32> to vector<4x256xf32>
    %213 = arith.mulf %211, %212 : vector<4x256xf32>
    %214 = arith.addf %208, %213 : vector<4x256xf32>
    %215 = vector.extract_strided_slice %1 {offsets = [0, 34], sizes = [4, 256], strides = [1, 1]} : vector<4x290xf32> to vector<4x256xf32>
    %216 = vector.broadcast %3 : vector<1x256xf32> to vector<4x256xf32>
    %217 = arith.mulf %215, %216 : vector<4x256xf32>
    %c0_39 = arith.constant 0 : index
    %c32 = arith.constant 32 : index
    %218 = vector.load %arg1[%c0_39, %c32] : memref<4x36xf32, #tpu.memory_space<vmem>>, vector<4x1xf32>
    %219 = vector.extract_strided_slice %217 {offsets = [0, 0], sizes = [1, 256], strides = [1, 1]} : vector<4x256xf32> to vector<1x256xf32>
    %220 = vector.broadcast %218 : vector<4x1xf32> to vector<4x256xf32>
    %221 = vector.broadcast %219 : vector<1x256xf32> to vector<4x256xf32>
    %222 = arith.mulf %220, %221 : vector<4x256xf32>
    %223 = arith.addf %214, %222 : vector<4x256xf32>
    %c0_40 = arith.constant 0 : index
    %c33 = arith.constant 33 : index
    %224 = vector.load %arg1[%c0_40, %c33] : memref<4x36xf32, #tpu.memory_space<vmem>>, vector<4x1xf32>
    %225 = vector.extract_strided_slice %217 {offsets = [1, 0], sizes = [1, 256], strides = [1, 1]} : vector<4x256xf32> to vector<1x256xf32>
    %226 = vector.broadcast %224 : vector<4x1xf32> to vector<4x256xf32>
    %227 = vector.broadcast %225 : vector<1x256xf32> to vector<4x256xf32>
    %228 = arith.mulf %226, %227 : vector<4x256xf32>
    %229 = arith.addf %223, %228 : vector<4x256xf32>
    %c0_41 = arith.constant 0 : index
    %c34 = arith.constant 34 : index
    %230 = vector.load %arg1[%c0_41, %c34] : memref<4x36xf32, #tpu.memory_space<vmem>>, vector<4x1xf32>
    %231 = vector.extract_strided_slice %217 {offsets = [2, 0], sizes = [1, 256], strides = [1, 1]} : vector<4x256xf32> to vector<1x256xf32>
    %232 = vector.broadcast %230 : vector<4x1xf32> to vector<4x256xf32>
    %233 = vector.broadcast %231 : vector<1x256xf32> to vector<4x256xf32>
    %234 = arith.mulf %232, %233 : vector<4x256xf32>
    %235 = arith.addf %229, %234 : vector<4x256xf32>
    %c0_42 = arith.constant 0 : index
    %c35 = arith.constant 35 : index
    %236 = vector.load %arg1[%c0_42, %c35] : memref<4x36xf32, #tpu.memory_space<vmem>>, vector<4x1xf32>
    %237 = vector.extract_strided_slice %217 {offsets = [3, 0], sizes = [1, 256], strides = [1, 1]} : vector<4x256xf32> to vector<1x256xf32>
    %238 = vector.broadcast %236 : vector<4x1xf32> to vector<4x256xf32>
    %239 = vector.broadcast %237 : vector<1x256xf32> to vector<4x256xf32>
    %240 = arith.mulf %238, %239 : vector<4x256xf32>
    %241 = arith.addf %235, %240 : vector<4x256xf32>
    %c0_43 = arith.constant 0 : index
    %c0_44 = arith.constant 0 : index
    %242 = vector.load %arg2[%c0_43, %c0_44] : memref<4x1xf32, #tpu.memory_space<vmem>>, vector<4x1xf32>
    %243 = vector.broadcast %242 : vector<4x1xf32> to vector<4x256xf32>
    %244 = arith.addf %241, %243 : vector<4x256xf32>
    %cst_45 = arith.constant 0.000000e+00 : f32
    %245 = vector.broadcast %cst_45 : f32 to vector<4x256xf32>
    %246 = arith.cmpf ogt, %244, %245 : vector<4x256xf32>
    %cst_46 = arith.constant 2.000000e-01 : f32
    %247 = vector.broadcast %cst_46 : f32 to vector<4x256xf32>
    %248 = arith.mulf %247, %244 : vector<4x256xf32>
    %249 = arith.select %246, %244, %248 : vector<4x256xi1>, vector<4x256xf32>
    %250 = arith.addf %111, %249 : vector<4x256xf32>
    %c0_47 = arith.constant 0 : index
    %c0_48 = arith.constant 0 : index
    %c0_49 = arith.constant 0 : index
    %251 = vector.load %arg5[%c0_47, %c0_48, %c0_49] : memref<1x4x256xf32, #tpu.memory_space<vmem>>, vector<1x4x256xf32>
    %252 = vector.shape_cast %251 : vector<1x4x256xf32> to vector<4x256xf32>
    %253 = vector.shape_cast %250 : vector<4x256xf32> to vector<1x4x256xf32>
    tpu.vector_store %arg5[%c0_47, %c0_48, %c0_49], %253 {strides = array<i32>} : memref<1x4x256xf32, #tpu.memory_space<vmem>>, vector<1x4x256xf32>,
    return
  }
  func.func @transform_0(%arg0: i32) -> (i32, i32) {
    %c0_i32 = arith.constant 0 : i32
    %c0_i32_0 = arith.constant 0 : i32
    %c0_i32_1 = arith.constant 0 : i32
    return %c0_i32, %c0_i32_0 : i32, i32
  }
  func.func @transform_1(%arg0: i32) -> (i32, i32) {
    %c0_i32 = arith.constant 0 : i32
    %c0_i32_0 = arith.constant 0 : i32
    %c0_i32_1 = arith.constant 0 : i32
    return %c0_i32, %c0_i32_0 : i32, i32
  }
  func.func @transform_2(%arg0: i32) -> (i32, i32) {
    %c0_i32 = arith.constant 0 : i32
    %c0_i32_0 = arith.constant 0 : i32
    %c0_i32_1 = arith.constant 0 : i32
    return %c0_i32, %c0_i32_0 : i32, i32
  }
  func.func @transform_3(%arg0: i32) -> (i32, i32, i32) {
    %c0_i32 = arith.constant 0 : i32
    %c0_i32_0 = arith.constant 0 : i32
    %c0_i32_1 = arith.constant 0 : i32
    return %arg0, %c0_i32, %c0_i32_0 : i32, i32, i32
  }
  func.func @transform_4(%arg0: i32) -> (i32, i32, i32) {
    %c0_i32 = arith.constant 0 : i32
    %c0_i32_0 = arith.constant 0 : i32
    %c0_i32_1 = arith.constant 0 : i32
    return %arg0, %c0_i32, %c0_i32_0 : i32, i32, i32
  }
}

</mosaic_0001>

<llo_original>
// kernel: tpu_custom_call.1
$region0: #{tpu_custom_call.1}
  #allocation0 [shape = 'u32[]', space=smem, size = 0x4, offset = 0x4, fixed_abs, tag = 'smem constant byte address 0x4 - core index']
  #allocation1 [shape = 'u32[72,128]{1,0:T(1,128)}', space=vmem, size = 0x9000, scoped, tag = 'internal scratch']
  %s0 = inlined_call_operand.vmem [shape: f32[4,36], index: 0, kind: input, shape index: {}]
  %s1 = inlined_call_operand.vmem [shape: f32[4,1], index: 1, kind: input, shape index: {}]
  %s2 = inlined_call_operand.hbm [shape: f32[2,256], index: 2, kind: input, shape index: {}]
  %s3 = inlined_call_operand.hbm [shape: f32[2,4,290], index: 3, kind: input, shape index: {}]
  %s4 = inlined_call_operand.hbm [shape: f32[2,4,256], index: 4, kind: output, shape index: {}]
  %s5 = sld [smem:[#allocation0]]
  $region57: #{tpu_custom_call.1} parent=0
    _
  %s7 = ssub.s32 1, %s5
  %s8 = scalar_select 0, %s7, %s5
  $region1: #{tpu_custom_call.1} parent=0
    #allocation2 [shape = 'u8[2048]{0}', space=vmem, size = 0x800, scoped, tag = 'input window, operand 2, single buffered']
    #allocation3 [shape = 's32[2]{0}', space=sflag, size = 0x8, scoped, tag = 'scoped memory for tpu_custom_call.1']
    #allocation4 [shape = 's32[2]{0}', space=sflag, size = 0x8, scoped, tag = 'scoped memory for tpu_custom_call.1']
    #allocation5 [shape = 'u8[12288]{0}', space=vmem, size = 0x3000, scoped, tag = 'input window, operand 3']
    #allocation6 [shape = 's32[2]{0}', space=sflag, size = 0x8, scoped, tag = 'scoped memory for tpu_custom_call.1']
    #allocation7 [shape = 'u8[8192]{0}', space=vmem, size = 0x2000, scoped, tag = 'output window, operand 0']
    %9 = vsyncpa [#allocation3], 0
    %10 = vsyncpa [#allocation6], 0
    %s11 = scalar_lea.sflag [#allocation6], 1
    %12 = vsyncpa %s11, 0
    %13 = vsyncpa [#allocation4], 0
    %s14 = scalar_lea.sflag [#allocation4], 1
    %15 = vsyncpa %s14, 0
    loop: start=0, step=1, limit=4
    $region2: #{tpu_custom_call.1} parent=1 // loop_pre_header
      _
    $region3: #{tpu_custom_call.1} parent=1 // loop_header
      %s17 = sphi 0, %s21
      %p18 = scmp.ge.s32.totalorder %s17, 4
      %s25 = sphi 0, %s25
      %s27 = sphi 0, %s25
      %s28 = sphi 0, %s27
      %s42 = sphi 0, %s28
      %s46 = sphi 0, %s46
      %s48 = sphi 0, %s46
      %s49 = sphi 0, %s48
      %s63 = sphi 0, %s49
      %s67 = sphi 0, %s67
      %s69 = sphi 0, %s67
      %s70 = sphi 0, %s69
      %s84 = sphi 0, %s70
      %s90 = sphi 0, %s92
      %s93 = sphi 0, %s90
      %s94 = sphi 0, %s93
      %s110 = sphi 0, %s94
      %s116 = sphi 0, %s118
      %s119 = sphi 0, %s116
      %s120 = sphi 0, %s119
      %s136 = sphi 0, %s120
    $region4: #{tpu_custom_call.1} parent=1 // loop_header_branch
      %20 = sbr.rel (%p18) target = $region8
    $region5: #{tpu_custom_call.1} parent=1 // loop_body
      %s22 = ssub.s32 %s17, 1
      %s23 = ssub.s32 %s17, 2
      %s24 = sadd.s32 %s17, 1
      %s26 = sadd.s32 %s25, 1
      %p29 = scmp.eq.s32.totalorder %s17, 1
      %p30 = scmp.ne.s32.totalorder %s25, %s27
      %p31 = scmp.eq.s32.totalorder %s17, 0
      %p32 = por %p30, %p31
      %p33 = scmp.ne.s32.totalorder %s25, %s27
      %p34 = scmp.eq.s32.totalorder %s22, 1
      %p35 = por %p33, %p34
      %p36 = scmp.ne.s32.totalorder %s27, %s28
      %p37 = scmp.eq.s32.totalorder %s22, 0
      %p38 = por %p36, %p37
      %p39 = scmp.ne.s32.totalorder %s27, %s28
      %p40 = scmp.eq.s32.totalorder %s23, 1
      %p41 = por %p39, %p40
      %p43 = scmp.ne.s32.totalorder %s28, %s42
      %p44 = scmp.eq.s32.totalorder %s23, 0
      %p45 = por %p43, %p44
      %s47 = sadd.s32 %s46, 1
      %p50 = scmp.eq.s32.totalorder %s17, 1
      %p51 = scmp.ne.s32.totalorder %s46, %s48
      %p52 = scmp.eq.s32.totalorder %s17, 0
      %p53 = por %p51, %p52
      %p54 = scmp.ne.s32.totalorder %s46, %s48
      %p55 = scmp.eq.s32.totalorder %s22, 1
      %p56 = por %p54, %p55
      %p57 = scmp.ne.s32.totalorder %s48, %s49
      %p58 = scmp.eq.s32.totalorder %s22, 0
      %p59 = por %p57, %p58
      %p60 = scmp.ne.s32.totalorder %s48, %s49
      %p61 = scmp.eq.s32.totalorder %s23, 1
      %p62 = por %p60, %p61
      %p64 = scmp.ne.s32.totalorder %s49, %s63
      %p65 = scmp.eq.s32.totalorder %s23, 0
      %p66 = por %p64, %p65
      %s68 = sadd.s32 %s67, 1
      %p71 = scmp.eq.s32.totalorder %s17, 1
      %p72 = scmp.ne.s32.totalorder %s67, %s69
      %p73 = scmp.eq.s32.totalorder %s17, 0
      %p74 = por %p72, %p73
      %p75 = scmp.ne.s32.totalorder %s67, %s69
      %p76 = scmp.eq.s32.totalorder %s22, 1
      %p77 = por %p75, %p76
      %p78 = scmp.ne.s32.totalorder %s69, %s70
      %p79 = scmp.eq.s32.totalorder %s22, 0
      %p80 = por %p78, %p79
      %p81 = scmp.ne.s32.totalorder %s69, %s70
      %p82 = scmp.eq.s32.totalorder %s23, 1
      %p83 = por %p81, %p82
      %p85 = scmp.ne.s32.totalorder %s70, %s84
      %p86 = scmp.eq.s32.totalorder %s23, 0
      %p87 = por %p85, %p86
      %s88 = ssub.s32 %s17, %s24
      %p89 = scmp.eq.s32.totalorder %s88, 0
      %s91 = sadd.s32 %s90, 1
      %s92 = scalar_select %p89, %s90, %s91
      %p95 = pneg %p89
      %p96 = scmp.eq.s32.totalorder %s17, 1
      %p97 = por %p95, %p96
      %p98 = scmp.ne.s32.totalorder %s90, %s93
      %p99 = scmp.eq.s32.totalorder %s17, 0
      %p100 = por %p98, %p99
      %p101 = scmp.ne.s32.totalorder %s90, %s93
      %p102 = scmp.eq.s32.totalorder %s22, 1
      %p103 = por %p101, %p102
      %p104 = scmp.ne.s32.totalorder %s93, %s94
      %p105 = scmp.eq.s32.totalorder %s22, 0
      %p106 = por %p104, %p105
      %p107 = scmp.ne.s32.totalorder %s93, %s94
      %p108 = scmp.eq.s32.totalorder %s23, 1
      %p109 = por %p107, %p108
      %p111 = scmp.ne.s32.totalorder %s94, %s110
      %p112 = scmp.eq.s32.totalorder %s23, 0
      %p113 = por %p111, %p112
      %s114 = ssub.s32 %s17, %s24
      %p115 = scmp.eq.s32.totalorder %s114, 0
      %s117 = sadd.s32 %s116, 1
      %s118 = scalar_select %p115, %s116, %s117
      %p121 = pneg %p115
      %p122 = scmp.eq.s32.totalorder %s17, 1
      %p123 = por %p121, %p122
      %p124 = scmp.ne.s32.totalorder %s116, %s119
      %p125 = scmp.eq.s32.totalorder %s17, 0
      %p126 = por %p124, %p125
      %p127 = scmp.ne.s32.totalorder %s116, %s119
      %p128 = scmp.eq.s32.totalorder %s22, 1
      %p129 = por %p127, %p128
      %p130 = scmp.ne.s32.totalorder %s119, %s120
      %p131 = scmp.eq.s32.totalorder %s22, 0
      %p132 = por %p130, %p131
      %p133 = scmp.ne.s32.totalorder %s119, %s120
      %p134 = scmp.eq.s32.totalorder %s23, 1
      %p135 = por %p133, %p134
      %p137 = scmp.ne.s32.totalorder %s120, %s136
      %p138 = scmp.eq.s32.totalorder %s23, 0
      %p139 = por %p137, %p138
      %p140 = scmp.le.s32.totalorder 1, %s17
      %p141 = scmp.lt.s32.totalorder %s17, 3
      %p142 = pnand %p140, %p141
      %p143 = pneg %p142
      // Predicated region
      $region9: #{tpu_custom_call.1} parent=5 // pred_check
        _
      $region10: #{tpu_custom_call.1} parent=5 // pred_check_branch
        %145 = sbr.rel (%p142) target = $region12
      $region11: #{tpu_custom_call.1} parent=5 // pred_region
        %s146 = ssub.s32 %s17, 1
        // Predicated region
        $region13: #{tpu_custom_call.1} parent=11 // pred_check
          %p147 = pneg %p38
        $region14: #{tpu_custom_call.1} parent=11 // pred_check_branch
          %149 = sbr.rel (%p147) target = $region16
        $region15: #{tpu_custom_call.1} parent=11 // pred_region
          _
        $region16: #{tpu_custom_call.1} parent=11 // pred_fallthru
          _
        // Predicated region
        $region17: #{tpu_custom_call.1} parent=11 // pred_check
          %p150 = pneg %p59
        $region18: #{tpu_custom_call.1} parent=11 // pred_check_branch
          %152 = sbr.rel (%p150) target = $region20
        $region19: #{tpu_custom_call.1} parent=11 // pred_region
          _
        $region20: #{tpu_custom_call.1} parent=11 // pred_fallthru
          _
        // Predicated region
        $region21: #{tpu_custom_call.1} parent=11 // pred_check
          %p153 = pneg %p80
        $region22: #{tpu_custom_call.1} parent=11 // pred_check_branch
          %155 = sbr.rel (%p153) target = $region24
        $region23: #{tpu_custom_call.1} parent=11 // pred_region
          %157 = vsyncadd [#allocation3], 0
          %s159 = sshll.u32 %s2, 4
          %s160 = int_to_ptr.hbm [resolvable:$true] %s159
          %s161 = sshll.u32 [#allocation2], 4
          %s162 = int_to_ptr.vmem [resolvable:$true] %s161
          %164 = dma.hbm_to_vmem [thread:$0]  %s160, 64, %s162, [#allocation3]
        $region24: #{tpu_custom_call.1} parent=11 // pred_fallthru
          _
      $region12: #{tpu_custom_call.1} parent=5 // pred_fallthru
        _
      %p165 = scmp.lt.s32.totalorder %s17, 2
      // Predicated region
      $region25: #{tpu_custom_call.1} parent=5 // pred_check
        %p166 = pneg %p165
      $region26: #{tpu_custom_call.1} parent=5 // pred_check_branch
        %168 = sbr.rel (%p166) target = $region28
      $region27: #{tpu_custom_call.1} parent=5 // pred_region
        // Predicated region
        $region29: #{tpu_custom_call.1} parent=27 // pred_check
          %p169 = pneg %p100
        $region30: #{tpu_custom_call.1} parent=27 // pred_check_branch
          %171 = sbr.rel (%p169) target = $region32
        $region31: #{tpu_custom_call.1} parent=27 // pred_region
          %s172 = sand.u32 %s90, 1
          %s173 = scalar_lea.sflag [#allocation6], %s172
          %s174 = sand.u32 %s90, 1
          %s175 = smul.addr %s174, 12
          %s176 = scalar_lea.vmem [#allocation5], %s175
          %178 = vsyncadd %s173, 0
          %s179 = smul.addr %s17, 3
          %s180 = smul.addr %s179, 4
          %s181 = scalar_lea.hbm %s3, %s180
          %s183 = sshll.u32 %s181, 4
          %s184 = int_to_ptr.hbm [resolvable:$true] %s183
          %s185 = sshll.u32 %s176, 4
          %s186 = int_to_ptr.vmem [resolvable:$true] %s185
          %188 = dma.hbm_to_vmem [thread:$0]  %s184, 192, %s186, %s173
        $region32: #{tpu_custom_call.1} parent=27 // pred_fallthru
          _
      $region28: #{tpu_custom_call.1} parent=5 // pred_fallthru
        _
      %p189 = scmp.le.s32.totalorder 1, %s17
      %p190 = scmp.lt.s32.totalorder %s17, 3
      %p191 = pnand %p189, %p190
      %p192 = pneg %p191
      // Predicated region
      $region33: #{tpu_custom_call.1} parent=5 // pred_check
        _
      $region34: #{tpu_custom_call.1} parent=5 // pred_check_branch
        %194 = sbr.rel (%p191) target = $region36
      $region35: #{tpu_custom_call.1} parent=5 // pred_region
        %s195 = ssub.s32 %s17, 1
        // Predicated region
        $region37: #{tpu_custom_call.1} parent=35 // pred_check
          %p196 = pneg %p80
        $region38: #{tpu_custom_call.1} parent=35 // pred_check_branch
          %198 = sbr.rel (%p196) target = $region40
        $region39: #{tpu_custom_call.1} parent=35 // pred_region
          %200 = dma.done [#allocation3], 64
        $region40: #{tpu_custom_call.1} parent=35 // pred_fallthru
          _
        %s201 = sand.u32 %s93, 1
        %s202 = scalar_lea.sflag [#allocation6], %s201
        %s203 = sand.u32 %s93, 1
        %s204 = smul.addr %s203, 12
        %s205 = scalar_lea.vmem [#allocation5], %s204
        // Predicated region
        $region41: #{tpu_custom_call.1} parent=35 // pred_check
          %p206 = pneg %p106
        $region42: #{tpu_custom_call.1} parent=35 // pred_check_branch
          %208 = sbr.rel (%p206) target = $region44
        $region43: #{tpu_custom_call.1} parent=35 // pred_region
          %210 = dma.done %s202, 192
        $region44: #{tpu_custom_call.1} parent=35 // pred_fallthru
          _
        %p211 = pneg %p38
        %p212 = pneg %p35
        %p213 = pneg %p59
        %p214 = pneg %p56
        %p215 = pneg %p80
        %p216 = pneg %p77
        %s217 = sand.u32 %s93, 1
        %s218 = scalar_lea.sflag [#allocation6], %s217
        %s219 = sand.u32 %s93, 1
        %s220 = smul.addr %s219, 12
        %s221 = scalar_lea.vmem [#allocation5], %s220
        %p222 = pneg %p106
        %p223 = pneg %p103
        %p224 = pneg %p132
        %p225 = pneg %p129
        %s226 = sand.u32 %s119, 1
        %s227 = scalar_lea.sflag [#allocation4], %s226
        %s228 = sand.u32 %s119, 1
        %s229 = smul.addr %s228, 8
        %s230 = scalar_lea.vmem [#allocation7], %s229
        %v231 = vld [vmem:[%s205] sm:$0xff]
        %v232 = vld [vmem:[%s205 + $0x8] sm:$0xf]
        %v233 = vld [vmem:[#allocation2] ss:$2 sm:$0x3]
        %s234 = scalar_lea.vmem [#allocation2], 1
        %v235 = vld [vmem:[%s234] ss:$2 sm:$0x3]
        %v237 = vperm.slane %v233, 0
        %v238 = vperm.slane %v233, 1
        %v239 = vrot.slane %v238, 4
        %vm240 = vcmask 1043456
        %v241 = vsel %vm240, %v237, %v239
        %v243 = vmul.f32 %v231, %v241
        %v244 = vld [vmem:[%s0] sm:$0xf]
        %246 = vset.pattern.permute.xlu0 0
        %247 = vperm.xlu0 %246, %v244
        %v248 = vpop.permute.xlu0 %247
        %v251 = vperm.slane %v243, 0
        %v252 = vperm.slane %v243, 4
        %v255 = vperm.slane %v251, 0
        %v256 = vperm.slane %v252, 0
        %v257 = vmul.f32 %v248, %v255
        %v258 = vmul.f32 %v248, %v256
        %v259 = vadd.f32 %v257, 0.0
        %v260 = vadd.f32 %v258, 0.0
        %261 = vset.pattern.permute.xlu0 1
        %262 = vperm.xlu0 %261, %v244
        %v263 = vpop.permute.xlu0 %262
        %v265 = vperm.slane %v243, 1
        %v266 = vperm.slane %v243, 5
        %v269 = vperm.slane %v265, 1
        %v270 = vperm.slane %v266, 1
        %v271 = vmul.f32 %v263, %v269
        %v272 = vmul.f32 %v263, %v270
        %v273 = vadd.f32 %v259, %v271
        %v274 = vadd.f32 %v260, %v272
        %275 = vset.pattern.permute.xlu0 2
        %276 = vperm.xlu0 %275, %v244
        %v277 = vpop.permute.xlu0 %276
        %v279 = vperm.slane %v243, 2
        %v280 = vperm.slane %v243, 6
        %v283 = vperm.slane %v279, 2
        %v284 = vperm.slane %v280, 2
        %v285 = vmul.f32 %v277, %v283
        %v286 = vmul.f32 %v277, %v284
        %v287 = vadd.f32 %v273, %v285
        %v288 = vadd.f32 %v274, %v286
        %289 = vset.pattern.permute.xlu0 3
        %290 = vperm.xlu0 %289, %v244
        %v291 = vpop.permute.xlu0 %290
        %v293 = vperm.slane %v243, 3
        %v294 = vperm.slane %v243, 7
        %v297 = vperm.slane %v293, 3
        %v298 = vperm.slane %v294, 3
        %v299 = vmul.f32 %v291, %v297
        %v300 = vmul.f32 %v291, %v298
        %v301 = vadd.f32 %v287, %v299
        %v302 = vadd.f32 %v288, %v300
        %303 = vset.pattern.permute.xlu0 4
        %304 = vperm.xlu0 %303, %v244
        %v305 = vpop.permute.xlu0 %304
        %v309 = vperm.slane %v231, 0
        %v310 = vperm.slane %v231, 4
        %v311 = vperm.slane %v232, 0
        %v315 = vperm.slane %v309, 0
        %v316 = vperm.slane %v310, 0
        %v317 = vperm.slane %v311, 0
        %v318 = vmul.f32 %v305, %v315
        %v319 = vmul.f32 %v305, %v316
        %v320 = vmul.f32 %v305, %v317
        %324 = vrot.lane.b32.xlu0 %v318, 127
        %v325 = vpop.permute.xlu0 %324
        %326 = vrot.lane.b32.xlu0 %v319, 127
        %v327 = vpop.permute.xlu0 %326
        %328 = vrot.lane.b32.xlu0 %v320, 127
        %v329 = vpop.permute.xlu0 %328
        %vm330 = vcmask 1039360
        %v331 = vsel %vm330, %v325, %v327
        %v332 = vsel %vm330, %v327, %v329
        %v335 = vadd.f32 %v301, %v331
        %v336 = vadd.f32 %v302, %v332
        %337 = vset.pattern.permute.xlu0 5
        %338 = vperm.xlu0 %337, %v244
        %v339 = vpop.permute.xlu0 %338
        %v341 = vperm.slane %v231, 1
        %v342 = vperm.slane %v231, 5
        %v343 = vperm.slane %v232, 1
        %v347 = vperm.slane %v341, 1
        %v348 = vperm.slane %v342, 1
        %v349 = vperm.slane %v343, 1
        %v350 = vmul.f32 %v339, %v347
        %v351 = vmul.f32 %v339, %v348
        %v352 = vmul.f32 %v339, %v349
        %356 = vrot.lane.b32.xlu0 %v350, 127
        %v357 = vpop.permute.xlu0 %356
        %358 = vrot.lane.b32.xlu0 %v351, 127
        %v359 = vpop.permute.xlu0 %358
        %360 = vrot.lane.b32.xlu0 %v352, 127
        %v361 = vpop.permute.xlu0 %360
        %v362 = vsel %vm330, %v357, %v359
        %v363 = vsel %vm330, %v359, %v361
        %v366 = vadd.f32 %v335, %v362
        %v367 = vadd.f32 %v336, %v363
        %368 = vset.pattern.permute.xlu0 6
        %369 = vperm.xlu0 %368, %v244
        %v370 = vpop.permute.xlu0 %369
        %v372 = vperm.slane %v231, 2
        %v373 = vperm.slane %v231, 6
        %v374 = vperm.slane %v232, 2
        %v378 = vperm.slane %v372, 2
        %v379 = vperm.slane %v373, 2
        %v380 = vperm.slane %v374, 2
        %v381 = vmul.f32 %v370, %v378
        %v382 = vmul.f32 %v370, %v379
        %v383 = vmul.f32 %v370, %v380
        %387 = vrot.lane.b32.xlu0 %v381, 127
        %v388 = vpop.permute.xlu0 %387
        %389 = vrot.lane.b32.xlu0 %v382, 127
        %v390 = vpop.permute.xlu0 %389
        %391 = vrot.lane.b32.xlu0 %v383, 127
        %v392 = vpop.permute.xlu0 %391
        %v393 = vsel %vm330, %v388, %v390
        %v394 = vsel %vm330, %v390, %v392
        %v397 = vadd.f32 %v366, %v393
        %v398 = vadd.f32 %v367, %v394
        %399 = vset.pattern.permute.xlu0 7
        %400 = vperm.xlu0 %399, %v244
        %v401 = vpop.permute.xlu0 %400
        %v403 = vperm.slane %v231, 3
        %v404 = vperm.slane %v231, 7
        %v405 = vperm.slane %v232, 3
        %v409 = vperm.slane %v403, 3
        %v410 = vperm.slane %v404, 3
        %v411 = vperm.slane %v405, 3
        %v412 = vmul.f32 %v401, %v409
        %v413 = vmul.f32 %v401, %v410
        %v414 = vmul.f32 %v401, %v411
        %418 = vrot.lane.b32.xlu0 %v412, 127
        %v419 = vpop.permute.xlu0 %418
        %420 = vrot.lane.b32.xlu0 %v413, 127
        %v421 = vpop.permute.xlu0 %420
        %422 = vrot.lane.b32.xlu0 %v414, 127
        %v423 = vpop.permute.xlu0 %422
        %v424 = vsel %vm330, %v419, %v421
        %v425 = vsel %vm330, %v421, %v423
        %v428 = vadd.f32 %v397, %v424
        %v429 = vadd.f32 %v398, %v425
        %v431 = vperm.slane %v235, 0
        %v432 = vperm.slane %v235, 1
        %v433 = vrot.slane %v432, 4
        %v434 = vsel %vm240, %v431, %v433
        %435 = vrot.lane.b32.xlu0 %v434, 2
        %v436 = vpop.permute.xlu0 %435
        %v437 = vrot.slane %v436, 4
        %vm438 = vcmask 15360
        %v439 = vsel %vm438, %v437, %v436
        %v442 = vmul.f32 %v231, %v439
        %v443 = vmul.f32 %v232, %v437
        %444 = vset.pattern.permute.xlu0 8
        %445 = vperm.xlu0 %444, %v244
        %v446 = vpop.permute.xlu0 %445
        %v450 = vperm.slane %v442, 0
        %v451 = vperm.slane %v442, 4
        %v452 = vperm.slane %v443, 0
        %v456 = vperm.slane %v450, 0
        %v457 = vperm.slane %v451, 0
        %v458 = vperm.slane %v452, 0
        %v459 = vmul.f32 %v446, %v456
        %v460 = vmul.f32 %v446, %v457
        %v461 = vmul.f32 %v446, %v458
        %465 = vrot.lane.b32.xlu0 %v459, 126
        %v466 = vpop.permute.xlu0 %465
        %467 = vrot.lane.b32.xlu0 %v460, 126
        %v468 = vpop.permute.xlu0 %467
        %469 = vrot.lane.b32.xlu0 %v461, 126
        %v470 = vpop.permute.xlu0 %469
        %vm471 = vcmask 1031168
        %v472 = vsel %vm471, %v466, %v468
        %v473 = vsel %vm471, %v468, %v470
        %v476 = vadd.f32 %v428, %v472
        %v477 = vadd.f32 %v429, %v473
        %478 = vset.pattern.permute.xlu0 9
        %479 = vperm.xlu0 %478, %v244
        %v480 = vpop.permute.xlu0 %479
        %v482 = vperm.slane %v442, 1
        %v483 = vperm.slane %v442, 5
        %v484 = vperm.slane %v443, 1
        %v488 = vperm.slane %v482, 1
        %v489 = vperm.slane %v483, 1
        %v490 = vperm.slane %v484, 1
        %v491 = vmul.f32 %v480, %v488
        %v492 = vmul.f32 %v480, %v489
        %v493 = vmul.f32 %v480, %v490
        %497 = vrot.lane.b32.xlu0 %v491, 126
        %v498 = vpop.permute.xlu0 %497
        %499 = vrot.lane.b32.xlu0 %v492, 126
        %v500 = vpop.permute.xlu0 %499
        %501 = vrot.lane.b32.xlu0 %v493, 126
        %v502 = vpop.permute.xlu0 %501
        %v503 = vsel %vm471, %v498, %v500
        %v504 = vsel %vm471, %v500, %v502
        %v507 = vadd.f32 %v476, %v503
        %v508 = vadd.f32 %v477, %v504
        %509 = vset.pattern.permute.xlu0 10
        %510 = vperm.xlu0 %509, %v244
        %v511 = vpop.permute.xlu0 %510
        %v513 = vperm.slane %v442, 2
        %v514 = vperm.slane %v442, 6
        %v515 = vperm.slane %v443, 2
        %v519 = vperm.slane %v513, 2
        %v520 = vperm.slane %v514, 2
        %v521 = vperm.slane %v515, 2
        %v522 = vmul.f32 %v511, %v519
        %v523 = vmul.f32 %v511, %v520
        %v524 = vmul.f32 %v511, %v521
        %528 = vrot.lane.b32.xlu0 %v522, 126
        %v529 = vpop.permute.xlu0 %528
        %530 = vrot.lane.b32.xlu0 %v523, 126
        %v531 = vpop.permute.xlu0 %530
        %532 = vrot.lane.b32.xlu0 %v524, 126
        %v533 = vpop.permute.xlu0 %532
        %v534 = vsel %vm471, %v529, %v531
        %v535 = vsel %vm471, %v531, %v533
        %v538 = vadd.f32 %v507, %v534
        %v539 = vadd.f32 %v508, %v535
        %540 = vset.pattern.permute.xlu0 11
        %541 = vperm.xlu0 %540, %v244
        %v542 = vpop.permute.xlu0 %541
        %v544 = vperm.slane %v442, 3
        %v545 = vperm.slane %v442, 7
        %v546 = vperm.slane %v443, 3
        %v550 = vperm.slane %v544, 3
        %v551 = vperm.slane %v545, 3
        %v552 = vperm.slane %v546, 3
        %v553 = vmul.f32 %v542, %v550
        %v554 = vmul.f32 %v542, %v551
        %v555 = vmul.f32 %v542, %v552
        %559 = vrot.lane.b32.xlu0 %v553, 126
        %v560 = vpop.permute.xlu0 %559
        %561 = vrot.lane.b32.xlu0 %v554, 126
        %v562 = vpop.permute.xlu0 %561
        %563 = vrot.lane.b32.xlu0 %v555, 126
        %v564 = vpop.permute.xlu0 %563
        %v565 = vsel %vm471, %v560, %v562
        %v566 = vsel %vm471, %v562, %v564
        %v569 = vadd.f32 %v538, %v565
        %v570 = vadd.f32 %v539, %v566
        %571 = vrot.lane.b32.xlu0 %v241, 16
        %v572 = vpop.permute.xlu0 %571
        %v573 = vrot.slane %v572, 4
        %vm574 = vcmask 130048
        %v575 = vsel %vm574, %v573, %v572
        %v578 = vmul.f32 %v231, %v575
        %v579 = vmul.f32 %v232, %v573
        %580 = vset.pattern.permute.xlu0 12
        %581 = vperm.xlu0 %580, %v244
        %v582 = vpop.permute.xlu0 %581
        %v586 = vperm.slane %v578, 0
        %v587 = vperm.slane %v578, 4
        %v588 = vperm.slane %v579, 0
        %v592 = vperm.slane %v586, 0
        %v593 = vperm.slane %v587, 0
        %v594 = vperm.slane %v588, 0
        %v595 = vmul.f32 %v582, %v592
        %v596 = vmul.f32 %v582, %v593
        %v597 = vmul.f32 %v582, %v594
        %601 = vrot.lane.b32.xlu0 %v595, 112
        %v602 = vpop.permute.xlu0 %601
        %603 = vrot.lane.b32.xlu0 %v596, 112
        %v604 = vpop.permute.xlu0 %603
        %605 = vrot.lane.b32.xlu0 %v597, 112
        %v606 = vpop.permute.xlu0 %605
        %vm607 = vcmask 916480
        %v608 = vsel %vm607, %v602, %v604
        %v609 = vsel %vm607, %v604, %v606
        %v612 = vadd.f32 %v569, %v608
        %v613 = vadd.f32 %v570, %v609
        %614 = vset.pattern.permute.xlu0 13
        %615 = vperm.xlu0 %614, %v244
        %v616 = vpop.permute.xlu0 %615
        %v618 = vperm.slane %v578, 1
        %v619 = vperm.slane %v578, 5
        %v620 = vperm.slane %v579, 1
        %v624 = vperm.slane %v618, 1
        %v625 = vperm.slane %v619, 1
        %v626 = vperm.slane %v620, 1
        %v627 = vmul.f32 %v616, %v624
        %v628 = vmul.f32 %v616, %v625
        %v629 = vmul.f32 %v616, %v626
        %633 = vrot.lane.b32.xlu0 %v627, 112
        %v634 = vpop.permute.xlu0 %633
        %635 = vrot.lane.b32.xlu0 %v628, 112
        %v636 = vpop.permute.xlu0 %635
        %637 = vrot.lane.b32.xlu0 %v629, 112
        %v638 = vpop.permute.xlu0 %637
        %v639 = vsel %vm607, %v634, %v636
        %v640 = vsel %vm607, %v636, %v638
        %v643 = vadd.f32 %v612, %v639
        %v644 = vadd.f32 %v613, %v640
        %645 = vset.pattern.permute.xlu0 14
        %646 = vperm.xlu0 %645, %v244
        %v647 = vpop.permute.xlu0 %646
        %v649 = vperm.slane %v578, 2
        %v650 = vperm.slane %v578, 6
        %v651 = vperm.slane %v579, 2
        %v655 = vperm.slane %v649, 2
        %v656 = vperm.slane %v650, 2
        %v657 = vperm.slane %v651, 2
        %v658 = vmul.f32 %v647, %v655
        %v659 = vmul.f32 %v647, %v656
        %v660 = vmul.f32 %v647, %v657
        %664 = vrot.lane.b32.xlu0 %v658, 112
        %v665 = vpop.permute.xlu0 %664
        %666 = vrot.lane.b32.xlu0 %v659, 112
        %v667 = vpop.permute.xlu0 %666
        %668 = vrot.lane.b32.xlu0 %v660, 112
        %v669 = vpop.permute.xlu0 %668
        %v670 = vsel %vm607, %v665, %v667
        %v671 = vsel %vm607, %v667, %v669
        %v674 = vadd.f32 %v643, %v670
        %v675 = vadd.f32 %v644, %v671
        %676 = vset.pattern.permute.xlu0 15
        %677 = vperm.xlu0 %676, %v244
        %v678 = vpop.permute.xlu0 %677
        %v680 = vperm.slane %v578, 3
        %v681 = vperm.slane %v578, 7
        %v682 = vperm.slane %v579, 3
        %v686 = vperm.slane %v680, 3
        %v687 = vperm.slane %v681, 3
        %v688 = vperm.slane %v682, 3
        %v689 = vmul.f32 %v678, %v686
        %v690 = vmul.f32 %v678, %v687
        %v691 = vmul.f32 %v678, %v688
        %695 = vrot.lane.b32.xlu0 %v689, 112
        %v696 = vpop.permute.xlu0 %695
        %697 = vrot.lane.b32.xlu0 %v690, 112
        %v698 = vpop.permute.xlu0 %697
        %699 = vrot.lane.b32.xlu0 %v691, 112
        %v700 = vpop.permute.xlu0 %699
        %v701 = vsel %vm607, %v696, %v698
        %v702 = vsel %vm607, %v698, %v700
        %v705 = vadd.f32 %v674, %v701
        %v706 = vadd.f32 %v675, %v702
        %707 = vset.pattern.permute.xlu0 16
        %708 = vperm.xlu0 %707, %v244
        %v709 = vpop.permute.xlu0 %708
        %v711 = vmul.f32 %v709, %v315
        %v712 = vmul.f32 %v709, %v316
        %v713 = vmul.f32 %v709, %v317
        %717 = vrot.lane.b32.xlu0 %v711, 111
        %v718 = vpop.permute.xlu0 %717
        %719 = vrot.lane.b32.xlu0 %v712, 111
        %v720 = vpop.permute.xlu0 %719
        %721 = vrot.lane.b32.xlu0 %v713, 111
        %v722 = vpop.permute.xlu0 %721
        %vm723 = vcmask 908288
        %v724 = vsel %vm723, %v718, %v720
        %v725 = vsel %vm723, %v720, %v722
        %v728 = vadd.f32 %v705, %v724
        %v729 = vadd.f32 %v706, %v725
        %730 = vset.pattern.permute.xlu0 17
        %731 = vperm.xlu0 %730, %v244
        %v732 = vpop.permute.xlu0 %731
        %v734 = vmul.f32 %v732, %v347
        %v735 = vmul.f32 %v732, %v348
        %v736 = vmul.f32 %v732, %v349
        %740 = vrot.lane.b32.xlu0 %v734, 111
        %v741 = vpop.permute.xlu0 %740
        %742 = vrot.lane.b32.xlu0 %v735, 111
        %v743 = vpop.permute.xlu0 %742
        %744 = vrot.lane.b32.xlu0 %v736, 111
        %v745 = vpop.permute.xlu0 %744
        %v746 = vsel %vm723, %v741, %v743
        %v747 = vsel %vm723, %v743, %v745
        %v750 = vadd.f32 %v728, %v746
        %v751 = vadd.f32 %v729, %v747
        %752 = vset.pattern.permute.xlu0 18
        %753 = vperm.xlu0 %752, %v244
        %v754 = vpop.permute.xlu0 %753
        %v756 = vmul.f32 %v754, %v378
        %v757 = vmul.f32 %v754, %v379
        %v758 = vmul.f32 %v754, %v380
        %762 = vrot.lane.b32.xlu0 %v756, 111
        %v763 = vpop.permute.xlu0 %762
        %764 = vrot.lane.b32.xlu0 %v757, 111
        %v765 = vpop.permute.xlu0 %764
        %766 = vrot.lane.b32.xlu0 %v758, 111
        %v767 = vpop.permute.xlu0 %766
        %v768 = vsel %vm723, %v763, %v765
        %v769 = vsel %vm723, %v765, %v767
        %v772 = vadd.f32 %v750, %v768
        %v773 = vadd.f32 %v751, %v769
        %774 = vset.pattern.permute.xlu0 19
        %775 = vperm.xlu0 %774, %v244
        %v776 = vpop.permute.xlu0 %775
        %v778 = vmul.f32 %v776, %v409
        %v779 = vmul.f32 %v776, %v410
        %v780 = vmul.f32 %v776, %v411
        %784 = vrot.lane.b32.xlu0 %v778, 111
        %v785 = vpop.permute.xlu0 %784
        %786 = vrot.lane.b32.xlu0 %v779, 111
        %v787 = vpop.permute.xlu0 %786
        %788 = vrot.lane.b32.xlu0 %v780, 111
        %v789 = vpop.permute.xlu0 %788
        %v790 = vsel %vm723, %v785, %v787
        %v791 = vsel %vm723, %v787, %v789
        %v794 = vadd.f32 %v772, %v790
        %v795 = vadd.f32 %v773, %v791
        %796 = vrot.lane.b32.xlu0 %v434, 18
        %v797 = vpop.permute.xlu0 %796
        %v798 = vrot.slane %v797, 4
        %vm799 = vcmask 146432
        %v800 = vsel %vm799, %v798, %v797
        %v803 = vmul.f32 %v231, %v800
        %v804 = vmul.f32 %v232, %v798
        %805 = vset.pattern.permute.xlu0 20
        %806 = vperm.xlu0 %805, %v244
        %v807 = vpop.permute.xlu0 %806
        %v811 = vperm.slane %v803, 0
        %v812 = vperm.slane %v803, 4
        %v813 = vperm.slane %v804, 0
        %v817 = vperm.slane %v811, 0
        %v818 = vperm.slane %v812, 0
        %v819 = vperm.slane %v813, 0
        %v820 = vmul.f32 %v807, %v817
        %v821 = vmul.f32 %v807, %v818
        %v822 = vmul.f32 %v807, %v819
        %826 = vrot.lane.b32.xlu0 %v820, 110
        %v827 = vpop.permute.xlu0 %826
        %828 = vrot.lane.b32.xlu0 %v821, 110
        %v829 = vpop.permute.xlu0 %828
        %830 = vrot.lane.b32.xlu0 %v822, 110
        %v831 = vpop.permute.xlu0 %830
        %vm832 = vcmask 900096
        %v833 = vsel %vm832, %v827, %v829
        %v834 = vsel %vm832, %v829, %v831
        %v837 = vadd.f32 %v794, %v833
        %v838 = vadd.f32 %v795, %v834
        %839 = vset.pattern.permute.xlu0 21
        %840 = vperm.xlu0 %839, %v244
        %v841 = vpop.permute.xlu0 %840
        %v843 = vperm.slane %v803, 1
        %v844 = vperm.slane %v803, 5
        %v845 = vperm.slane %v804, 1
        %v849 = vperm.slane %v843, 1
        %v850 = vperm.slane %v844, 1
        %v851 = vperm.slane %v845, 1
        %v852 = vmul.f32 %v841, %v849
        %v853 = vmul.f32 %v841, %v850
        %v854 = vmul.f32 %v841, %v851
        %858 = vrot.lane.b32.xlu0 %v852, 110
        %v859 = vpop.permute.xlu0 %858
        %860 = vrot.lane.b32.xlu0 %v853, 110
        %v861 = vpop.permute.xlu0 %860
        %862 = vrot.lane.b32.xlu0 %v854, 110
        %v863 = vpop.permute.xlu0 %862
        %v864 = vsel %vm832, %v859, %v861
        %v865 = vsel %vm832, %v861, %v863
        %v868 = vadd.f32 %v837, %v864
        %v869 = vadd.f32 %v838, %v865
        %870 = vset.pattern.permute.xlu0 22
        %871 = vperm.xlu0 %870, %v244
        %v872 = vpop.permute.xlu0 %871
        %v874 = vperm.slane %v803, 2
        %v875 = vperm.slane %v803, 6
        %v876 = vperm.slane %v804, 2
        %v880 = vperm.slane %v874, 2
        %v881 = vperm.slane %v875, 2
        %v882 = vperm.slane %v876, 2
        %v883 = vmul.f32 %v872, %v880
        %v884 = vmul.f32 %v872, %v881
        %v885 = vmul.f32 %v872, %v882
        %889 = vrot.lane.b32.xlu0 %v883, 110
        %v890 = vpop.permute.xlu0 %889
        %891 = vrot.lane.b32.xlu0 %v884, 110
        %v892 = vpop.permute.xlu0 %891
        %893 = vrot.lane.b32.xlu0 %v885, 110
        %v894 = vpop.permute.xlu0 %893
        %v895 = vsel %vm832, %v890, %v892
        %v896 = vsel %vm832, %v892, %v894
        %v899 = vadd.f32 %v868, %v895
        %v900 = vadd.f32 %v869, %v896
        %901 = vset.pattern.permute.xlu0 23
        %902 = vperm.xlu0 %901, %v244
        %v903 = vpop.permute.xlu0 %902
        %v905 = vperm.slane %v803, 3
        %v906 = vperm.slane %v803, 7
        %v907 = vperm.slane %v804, 3
        %v911 = vperm.slane %v905, 3
        %v912 = vperm.slane %v906, 3
        %v913 = vperm.slane %v907, 3
        %v914 = vmul.f32 %v903, %v911
        %v915 = vmul.f32 %v903, %v912
        %v916 = vmul.f32 %v903, %v913
        %920 = vrot.lane.b32.xlu0 %v914, 110
        %v921 = vpop.permute.xlu0 %920
        %922 = vrot.lane.b32.xlu0 %v915, 110
        %v923 = vpop.permute.xlu0 %922
        %924 = vrot.lane.b32.xlu0 %v916, 110
        %v925 = vpop.permute.xlu0 %924
        %v926 = vsel %vm832, %v921, %v923
        %v927 = vsel %vm832, %v923, %v925
        %v930 = vadd.f32 %v899, %v926
        %v931 = vadd.f32 %v900, %v927
        %932 = vrot.lane.b32.xlu0 %v241, 32
        %v933 = vpop.permute.xlu0 %932
        %v934 = vrot.slane %v933, 4
        %vm935 = vcmask 261120
        %v936 = vsel %vm935, %v934, %v933
        %v939 = vmul.f32 %v231, %v936
        %v940 = vmul.f32 %v232, %v934
        %941 = vset.pattern.permute.xlu0 24
        %942 = vperm.xlu0 %941, %v244
        %v943 = vpop.permute.xlu0 %942
        %v947 = vperm.slane %v939, 0
        %v948 = vperm.slane %v939, 4
        %v949 = vperm.slane %v940, 0
        %v953 = vperm.slane %v947, 0
        %v954 = vperm.slane %v948, 0
        %v955 = vperm.slane %v949, 0
        %v956 = vmul.f32 %v943, %v953
        %v957 = vmul.f32 %v943, %v954
        %v958 = vmul.f32 %v943, %v955
        %962 = vrot.lane.b32.xlu0 %v956, 96
        %v963 = vpop.permute.xlu0 %962
        %964 = vrot.lane.b32.xlu0 %v957, 96
        %v965 = vpop.permute.xlu0 %964
        %966 = vrot.lane.b32.xlu0 %v958, 96
        %v967 = vpop.permute.xlu0 %966
        %vm968 = vcmask 785408
        %v969 = vsel %vm968, %v963, %v965
        %v970 = vsel %vm968, %v965, %v967
        %v973 = vadd.f32 %v930, %v969
        %v974 = vadd.f32 %v931, %v970
        %975 = vset.pattern.permute.xlu0 25
        %976 = vperm.xlu0 %975, %v244
        %v977 = vpop.permute.xlu0 %976
        %v979 = vperm.slane %v939, 1
        %v980 = vperm.slane %v939, 5
        %v981 = vperm.slane %v940, 1
        %v985 = vperm.slane %v979, 1
        %v986 = vperm.slane %v980, 1
        %v987 = vperm.slane %v981, 1
        %v988 = vmul.f32 %v977, %v985
        %v989 = vmul.f32 %v977, %v986
        %v990 = vmul.f32 %v977, %v987
        %994 = vrot.lane.b32.xlu0 %v988, 96
        %v995 = vpop.permute.xlu0 %994
        %996 = vrot.lane.b32.xlu0 %v989, 96
        %v997 = vpop.permute.xlu0 %996
        %998 = vrot.lane.b32.xlu0 %v990, 96
        %v999 = vpop.permute.xlu0 %998
        %v1000 = vsel %vm968, %v995, %v997
        %v1001 = vsel %vm968, %v997, %v999
        %v1004 = vadd.f32 %v973, %v1000
        %v1005 = vadd.f32 %v974, %v1001
        %1006 = vset.pattern.permute.xlu0 26
        %1007 = vperm.xlu0 %1006, %v244
        %v1008 = vpop.permute.xlu0 %1007
        %v1010 = vperm.slane %v939, 2
        %v1011 = vperm.slane %v939, 6
        %v1012 = vperm.slane %v940, 2
        %v1016 = vperm.slane %v1010, 2
        %v1017 = vperm.slane %v1011, 2
        %v1018 = vperm.slane %v1012, 2
        %v1019 = vmul.f32 %v1008, %v1016
        %v1020 = vmul.f32 %v1008, %v1017
        %v1021 = vmul.f32 %v1008, %v1018
        %1025 = vrot.lane.b32.xlu0 %v1019, 96
        %v1026 = vpop.permute.xlu0 %1025
        %1027 = vrot.lane.b32.xlu0 %v1020, 96
        %v1028 = vpop.permute.xlu0 %1027
        %1029 = vrot.lane.b32.xlu0 %v1021, 96
        %v1030 = vpop.permute.xlu0 %1029
        %v1031 = vsel %vm968, %v1026, %v1028
        %v1032 = vsel %vm968, %v1028, %v1030
        %v1035 = vadd.f32 %v1004, %v1031
        %v1036 = vadd.f32 %v1005, %v1032
        %1037 = vset.pattern.permute.xlu0 27
        %1038 = vperm.xlu0 %1037, %v244
        %v1039 = vpop.permute.xlu0 %1038
        %v1041 = vperm.slane %v939, 3
        %v1042 = vperm.slane %v939, 7
        %v1043 = vperm.slane %v940, 3
        %v1047 = vperm.slane %v1041, 3
        %v1048 = vperm.slane %v1042, 3
        %v1049 = vperm.slane %v1043, 3
        %v1050 = vmul.f32 %v1039, %v1047
        %v1051 = vmul.f32 %v1039, %v1048
        %v1052 = vmul.f32 %v1039, %v1049
        %1056 = vrot.lane.b32.xlu0 %v1050, 96
        %v1057 = vpop.permute.xlu0 %1056
        %1058 = vrot.lane.b32.xlu0 %v1051, 96
        %v1059 = vpop.permute.xlu0 %1058
        %1060 = vrot.lane.b32.xlu0 %v1052, 96
        %v1061 = vpop.permute.xlu0 %1060
        %v1062 = vsel %vm968, %v1057, %v1059
        %v1063 = vsel %vm968, %v1059, %v1061
        %v1066 = vadd.f32 %v1035, %v1062
        %v1067 = vadd.f32 %v1036, %v1063
        %1068 = vset.pattern.permute.xlu0 28
        %1069 = vperm.xlu0 %1068, %v244
        %v1070 = vpop.permute.xlu0 %1069
        %v1072 = vmul.f32 %v1070, %v315
        %v1073 = vmul.f32 %v1070, %v316
        %v1074 = vmul.f32 %v1070, %v317
        %1078 = vrot.lane.b32.xlu0 %v1072, 95
        %v1079 = vpop.permute.xlu0 %1078
        %1080 = vrot.lane.b32.xlu0 %v1073, 95
        %v1081 = vpop.permute.xlu0 %1080
        %1082 = vrot.lane.b32.xlu0 %v1074, 95
        %v1083 = vpop.permute.xlu0 %1082
        %vm1084 = vcmask 777216
        %v1085 = vsel %vm1084, %v1079, %v1081
        %v1086 = vsel %vm1084, %v1081, %v1083
        %v1089 = vadd.f32 %v1066, %v1085
        %v1090 = vadd.f32 %v1067, %v1086
        %1091 = vset.pattern.permute.xlu0 29
        %1092 = vperm.xlu0 %1091, %v244
        %v1093 = vpop.permute.xlu0 %1092
        %v1095 = vmul.f32 %v1093, %v347
        %v1096 = vmul.f32 %v1093, %v348
        %v1097 = vmul.f32 %v1093, %v349
        %1101 = vrot.lane.b32.xlu0 %v1095, 95
        %v1102 = vpop.permute.xlu0 %1101
        %1103 = vrot.lane.b32.xlu0 %v1096, 95
        %v1104 = vpop.permute.xlu0 %1103
        %1105 = vrot.lane.b32.xlu0 %v1097, 95
        %v1106 = vpop.permute.xlu0 %1105
        %v1107 = vsel %vm1084, %v1102, %v1104
        %v1108 = vsel %vm1084, %v1104, %v1106
        %v1111 = vadd.f32 %v1089, %v1107
        %v1112 = vadd.f32 %v1090, %v1108
        %1113 = vset.pattern.permute.xlu0 30
        %1114 = vperm.xlu0 %1113, %v244
        %v1115 = vpop.permute.xlu0 %1114
        %v1117 = vmul.f32 %v1115, %v378
        %v1118 = vmul.f32 %v1115, %v379
        %v1119 = vmul.f32 %v1115, %v380
        %1123 = vrot.lane.b32.xlu0 %v1117, 95
        %v1124 = vpop.permute.xlu0 %1123
        %1125 = vrot.lane.b32.xlu0 %v1118, 95
        %v1126 = vpop.permute.xlu0 %1125
        %1127 = vrot.lane.b32.xlu0 %v1119, 95
        %v1128 = vpop.permute.xlu0 %1127
        %v1129 = vsel %vm1084, %v1124, %v1126
        %v1130 = vsel %vm1084, %v1126, %v1128
        %v1133 = vadd.f32 %v1111, %v1129
        %v1134 = vadd.f32 %v1112, %v1130
        %1135 = vset.pattern.permute.xlu0 31
        %1136 = vperm.xlu0 %1135, %v244
        %v1137 = vpop.permute.xlu0 %1136
        %v1139 = vmul.f32 %v1137, %v409
        %v1140 = vmul.f32 %v1137, %v410
        %v1141 = vmul.f32 %v1137, %v411
        %1145 = vrot.lane.b32.xlu0 %v1139, 95
        %v1146 = vpop.permute.xlu0 %1145
        %1147 = vrot.lane.b32.xlu0 %v1140, 95
        %v1148 = vpop.permute.xlu0 %1147
        %1149 = vrot.lane.b32.xlu0 %v1141, 95
        %v1150 = vpop.permute.xlu0 %1149
        %v1151 = vsel %vm1084, %v1146, %v1148
        %v1152 = vsel %vm1084, %v1148, %v1150
        %v1155 = vadd.f32 %v1133, %v1151
        %v1156 = vadd.f32 %v1134, %v1152
        %1157 = vrot.lane.b32.xlu0 %v434, 34
        %v1158 = vpop.permute.xlu0 %1157
        %v1159 = vrot.slane %v1158, 4
        %vm1160 = vcmask 277504
        %v1161 = vsel %vm1160, %v1159, %v1158
        %v1164 = vmul.f32 %v231, %v1161
        %v1165 = vmul.f32 %v232, %v1159
        %1166 = vset.pattern.permute.xlu0 32
        %1167 = vperm.xlu0 %1166, %v244
        %v1168 = vpop.permute.xlu0 %1167
        %v1172 = vperm.slane %v1164, 0
        %v1173 = vperm.slane %v1164, 4
        %v1174 = vperm.slane %v1165, 0
        %v1178 = vperm.slane %v1172, 0
        %v1179 = vperm.slane %v1173, 0
        %v1180 = vperm.slane %v1174, 0
        %v1181 = vmul.f32 %v1168, %v1178
        %v1182 = vmul.f32 %v1168, %v1179
        %v1183 = vmul.f32 %v1168, %v1180
        %1187 = vrot.lane.b32.xlu0 %v1181, 94
        %v1188 = vpop.permute.xlu0 %1187
        %1189 = vrot.lane.b32.xlu0 %v1182, 94
        %v1190 = vpop.permute.xlu0 %1189
        %1191 = vrot.lane.b32.xlu0 %v1183, 94
        %v1192 = vpop.permute.xlu0 %1191
        %vm1193 = vcmask 769024
        %v1194 = vsel %vm1193, %v1188, %v1190
        %v1195 = vsel %vm1193, %v1190, %v1192
        %v1198 = vadd.f32 %v1155, %v1194
        %v1199 = vadd.f32 %v1156, %v1195
        %1200 = vset.pattern.permute.xlu0 33
        %1201 = vperm.xlu0 %1200, %v244
        %v1202 = vpop.permute.xlu0 %1201
        %v1204 = vperm.slane %v1164, 1
        %v1205 = vperm.slane %v1164, 5
        %v1206 = vperm.slane %v1165, 1
        %v1210 = vperm.slane %v1204, 1
        %v1211 = vperm.slane %v1205, 1
        %v1212 = vperm.slane %v1206, 1
        %v1213 = vmul.f32 %v1202, %v1210
        %v1214 = vmul.f32 %v1202, %v1211
        %v1215 = vmul.f32 %v1202, %v1212
        %1219 = vrot.lane.b32.xlu0 %v1213, 94
        %v1220 = vpop.permute.xlu0 %1219
        %1221 = vrot.lane.b32.xlu0 %v1214, 94
        %v1222 = vpop.permute.xlu0 %1221
        %1223 = vrot.lane.b32.xlu0 %v1215, 94
        %v1224 = vpop.permute.xlu0 %1223
        %v1225 = vsel %vm1193, %v1220, %v1222
        %v1226 = vsel %vm1193, %v1222, %v1224
        %v1229 = vadd.f32 %v1198, %v1225
        %v1230 = vadd.f32 %v1199, %v1226
        %1231 = vset.pattern.permute.xlu0 34
        %1232 = vperm.xlu0 %1231, %v244
        %v1233 = vpop.permute.xlu0 %1232
        %v1235 = vperm.slane %v1164, 2
        %v1236 = vperm.slane %v1164, 6
        %v1237 = vperm.slane %v1165, 2
        %v1241 = vperm.slane %v1235, 2
        %v1242 = vperm.slane %v1236, 2
        %v1243 = vperm.slane %v1237, 2
        %v1244 = vmul.f32 %v1233, %v1241
        %v1245 = vmul.f32 %v1233, %v1242
        %v1246 = vmul.f32 %v1233, %v1243
        %1250 = vrot.lane.b32.xlu0 %v1244, 94
        %v1251 = vpop.permute.xlu0 %1250
        %1252 = vrot.lane.b32.xlu0 %v1245, 94
        %v1253 = vpop.permute.xlu0 %1252
        %1254 = vrot.lane.b32.xlu0 %v1246, 94
        %v1255 = vpop.permute.xlu0 %1254
        %v1256 = vsel %vm1193, %v1251, %v1253
        %v1257 = vsel %vm1193, %v1253, %v1255
        %v1260 = vadd.f32 %v1229, %v1256
        %v1261 = vadd.f32 %v1230, %v1257
        %1262 = vset.pattern.permute.xlu0 35
        %1263 = vperm.xlu0 %1262, %v244
        %v1264 = vpop.permute.xlu0 %1263
        %v1266 = vperm.slane %v1164, 3
        %v1267 = vperm.slane %v1164, 7
        %v1268 = vperm.slane %v1165, 3
        %v1272 = vperm.slane %v1266, 3
        %v1273 = vperm.slane %v1267, 3
        %v1274 = vperm.slane %v1268, 3
        %v1275 = vmul.f32 %v1264, %v1272
        %v1276 = vmul.f32 %v1264, %v1273
        %v1277 = vmul.f32 %v1264, %v1274
        %1281 = vrot.lane.b32.xlu0 %v1275, 94
        %v1282 = vpop.permute.xlu0 %1281
        %1283 = vrot.lane.b32.xlu0 %v1276, 94
        %v1284 = vpop.permute.xlu0 %1283
        %1285 = vrot.lane.b32.xlu0 %v1277, 94
        %v1286 = vpop.permute.xlu0 %1285
        %v1287 = vsel %vm1193, %v1282, %v1284
        %v1288 = vsel %vm1193, %v1284, %v1286
        %v1291 = vadd.f32 %v1260, %v1287
        %v1292 = vadd.f32 %v1261, %v1288
        %v1293 = vld [vmem:[%s1] sm:$0xf]
        %1295 = vset.pattern.permute.xlu0 0
        %1296 = vperm.xlu0 %1295, %v1293
        %v1297 = vpop.permute.xlu0 %1296
        %v1299 = vadd.f32 %v1291, %v1297
        %v1300 = vadd.f32 %v1292, %v1297
        %vm1301 = vcmp.gt.f32.partialorder %v1299, 0.0
        %vm1302 = vcmp.gt.f32.partialorder %v1300, 0.0
        %v1303 = vmul.f32 %v1299, 0.2
        %v1304 = vmul.f32 %v1300, 0.2
        %v1305 = vsel %vm1301, %v1299, %v1303
        %v1306 = vsel %vm1302, %v1300, %v1304
        %v1309 = vrot.slane %v1306, 4
        %v1310 = vsel %vm240, %v1305, %v1309
        %1311 = vrot.lane.b32.xlu0 %v1310, 17
        %v1312 = vpop.permute.xlu0 %1311
        %v1313 = vrot.slane %v1312, 4
        %vm1314 = vcmask 138240
        %v1315 = vsel %vm1314, %v1313, %v1312
        %v1318 = vadd.f32 %v231, %v1315
        %v1319 = vadd.f32 %v232, %v1313
        %1322 = vrot.lane.b32.xlu0 %v1318, 111
        %v1323 = vpop.permute.xlu0 %1322
        %1324 = vrot.lane.b32.xlu0 %v1319, 111
        %v1325 = vpop.permute.xlu0 %1324
        %v1326 = vrot.slane %v1323, 4
        %v1327 = vrot.slane %v1325, 4
        %v1328 = vsel %vm240, %v1326, %v1327
        %v1329 = vsel %vm723, %v1323, %v1328
        %1331 = vst [vmem:[%s230] sm:$0xff] %v1329
        %s1332 = sand.u32 %s119, 1
        %s1333 = scalar_lea.sflag [#allocation4], %s1332
        %s1334 = sand.u32 %s119, 1
        %s1335 = smul.addr %s1334, 8
        %s1336 = scalar_lea.vmem [#allocation7], %s1335
        // Predicated region
        $region45: #{tpu_custom_call.1} parent=35 // pred_check
          %p1337 = pneg %p129
        $region46: #{tpu_custom_call.1} parent=35 // pred_check_branch
          %1339 = sbr.rel (%p1337) target = $region48
        $region47: #{tpu_custom_call.1} parent=35 // pred_region
          %1341 = vsyncadd %s1333, 0
          %s1342 = smul.addr %s22, 2
          %s1343 = smul.addr %s1342, 4
          %s1344 = scalar_lea.hbm %s4, %s1343
          %s1346 = sshll.u32 %s1336, 4
          %s1347 = int_to_ptr.vmem [resolvable:$true] %s1346
          %s1348 = sshll.u32 %s1344, 4
          %s1349 = int_to_ptr.hbm [resolvable:$true] %s1348
          %1351 = dma.vmem_to_hbm [thread:$0]  %s1347, 128, %s1349, %s1333
        $region48: #{tpu_custom_call.1} parent=35 // pred_fallthru
          _
      $region36: #{tpu_custom_call.1} parent=5 // pred_fallthru
        _
      %p1352 = scmp.le.s32.totalorder 2, %s17
      // Predicated region
      $region49: #{tpu_custom_call.1} parent=5 // pred_check
        %p1353 = pneg %p1352
      $region50: #{tpu_custom_call.1} parent=5 // pred_check_branch
        %1355 = sbr.rel (%p1353) target = $region52
      $region51: #{tpu_custom_call.1} parent=5 // pred_region
        %s1356 = ssub.s32 %s17, 2
        // Predicated region
        $region53: #{tpu_custom_call.1} parent=51 // pred_check
          %p1357 = pneg %p135
        $region54: #{tpu_custom_call.1} parent=51 // pred_check_branch
          %1359 = sbr.rel (%p1357) target = $region56
        $region55: #{tpu_custom_call.1} parent=51 // pred_region
          %s1360 = sand.u32 %s120, 1
          %s1361 = scalar_lea.sflag [#allocation4], %s1360
          %s1362 = sand.u32 %s120, 1
          %s1363 = smul.addr %s1362, 8
          %s1364 = scalar_lea.vmem [#allocation7], %s1363
          %1366 = dma.done %s1361, 128
        $region56: #{tpu_custom_call.1} parent=51 // pred_fallthru
          _
      $region52: #{tpu_custom_call.1} parent=5 // pred_fallthru
        _
    $region6: #{tpu_custom_call.1} parent=1 // loop_footer
      %s21 = sadd.s32 1, %s17
    $region7: #{tpu_custom_call.1} parent=1 // loop_footer_branch
      %16 = sbr.rel target = $region3
    $region8: #{tpu_custom_call.1} parent=1 // loop_exit
      _
    %1367 = vsyncpa [#allocation3], 1
    %s1368 = scalar_lea.sflag [#allocation3], 1
    %1369 = vsyncpa %s1368, 1
    %1370 = vsyncpa [#allocation6], 1
    %s1371 = scalar_lea.sflag [#allocation6], 1
    %1372 = vsyncpa %s1371, 1
    %1373 = vsyncpa [#allocation4], 1
    %s1374 = scalar_lea.sflag [#allocation4], 1
    %1375 = vsyncpa %s1374, 1

</llo_original>
